<compile_context>
chip_gen: v6e
topology: v6e:2x2x1
jax: 0.10.0
libtpu: 0.0.40
codegen_flags: <defaults>
</compile_context>

<pallas_src>
import jax
import jax.numpy as jnp
from jax.experimental import pallas as pl
from jax.experimental.pallas import tpu as pltpu

EPS = 1e-12  # torch.nn.functional.normalize default eps


def _round_up(x, m):
    return ((x + m - 1) // m) * m


def _chip_config():
    """Per-generation tiling / VMEM defaults.

    v5e/v6e: 128 MiB VMEM -> big tiles, high cap.
    v7x:      64 MiB VMEM, 2 TensorCores -> tighter cap, split batch axis.
    """
    vmem_bytes = 64 * 1024 * 1024
    try:
        vmem_bytes = int(pltpu.get_tpu_info().vmem_capacity_bytes)
    except Exception:
        pass  # conservative default (v7x-sized) if the query is unavailable
    if vmem_bytes >= 96 * 1024 * 1024:
        return dict(bt_max=512, tk_max=1024,
                    vmem_cap=100 * 1024 * 1024, split_batch_for_cores=False)
    return dict(bt_max=256, tk_max=512,
                vmem_cap=36 * 1024 * 1024, split_batch_for_cores=True)


def kv_forward_kernel(x_ref, w_ref, key_ref, out_ref, acc_ref):
    k_step = pl.program_id(1)

    @pl.when(k_step == 0)
    def _init():
        acc_ref[...] = jnp.zeros_like(acc_ref)

    # Embedding stand-in, K-tiled: acc += x_tile @ w_tile.T -> (bt, D);
    # bf16 MXU products, f32 accumulation.
    acc_ref[...] += jax.lax.dot_general(
        x_ref[...], w_ref[...],
        dimension_numbers=(((1,), (1,)), ((), ())),
        preferred_element_type=jnp.float32,
    )

    @pl.when(k_step == pl.num_programs(1) - 1)
    def _finalize():
        q = acc_ref[...]                                       # (bt, D) f32
        # Deferred query L2-normalization: rsqrt (EUP slot) of row sum-sq,
        # applied to the small (bt, NC) logits tile below.
        inv_qn = jax.lax.rsqrt(
            jnp.maximum(jnp.sum(q * q, axis=-1, keepdims=True), EPS * EPS))
        # key_ref is already L2-normalized (done once in prepare_weights).
        s = jax.lax.dot_general(
            q.astype(jnp.bfloat16), key_ref[...],
            dimension_numbers=(((1,), (1,)), ((), ())),
            preferred_element_type=jnp.float32,
        )
        out_ref[...] = (s * inv_qn).astype(out_ref.dtype)


def prepare_weights(w_embed, key_mem, *, config=None):
    """One-time weight prep: pad to lane-aligned bf16 and L2-normalize key_mem.

    Hoisted out of the per-step forward so the f32->bf16 cast / pad of W and
    the constant key normalization are not redone on every call.
    """
    if config is None:
        config = _chip_config()
    D, K = w_embed.shape
    NC, Dk = key_mem.shape
    assert Dk == D

    tk = min(config["tk_max"], _round_up(K, 128))   # reduction tile
    k_pad = _round_up(K, tk)
    d_pad = _round_up(D, 128)                       # lane-dense feature dim
    nc_pad = _round_up(NC, 128)                     # lane-dense output dim

    wp = jnp.pad(w_embed.astype(jnp.bfloat16),
                 ((0, d_pad - D), (0, k_pad - K)))

    key_f32 = key_mem.astype(jnp.float32)
    inv_kn = jax.lax.rsqrt(
        jnp.maximum(jnp.sum(key_f32 * key_f32, axis=-1, keepdims=True),
                    EPS * EPS))
    kp = jnp.pad((key_f32 * inv_kn).astype(jnp.bfloat16),
                 ((0, nc_pad - NC), (0, d_pad - D)))

    geom = dict(K=K, D=D, NC=NC, tk=tk, k_pad=k_pad,
                d_pad=d_pad, nc_pad=nc_pad)
    return wp, kp, geom, config


def key_value_forward_prepared(x_nchw, wp, kp, geom, config):
    """KeyValueNetwork forward (mode='meta') with pre-prepared weights."""
    B = x_nchw.shape[0]
    x_flat = x_nchw.reshape(B, -1)
    K, tk, k_pad = geom["K"], geom["tk"], geom["k_pad"]
    d_pad, nc_pad, NC = geom["d_pad"], geom["nc_pad"], geom["NC"]
    assert x_flat.shape[1] == K

    # Batch tile: sublane-aligned; large to amortize the per-batch-tile
    # re-stream of W (HBM-bound).  On 2-TC chips make sure the "parallel"
    # batch axis has at least two tiles so both cores get work.
    bt = min(config["bt_max"], _round_up(B, 16))
    if config["split_batch_for_cores"] and B > 16:
        bt = min(bt, _round_up(_round_up(B, 16) // 2, 16))
    b_pad = _round_up(B, bt)

    xp = jnp.pad(x_flat.astype(jnp.bfloat16),
                 ((0, b_pad - B), (0, k_pad - K)))

    grid = (b_pad // bt, k_pad // tk)
    n_batch_tiles = b_pad // bt

    # VMEM budget (worst case: key block counted double-buffered for the
    # fallback path), with headroom, capped per generation.
    vmem_need = (2 * bt * tk * 2            # x tiles (bf16, double-buffered)
                 + 2 * d_pad * tk * 2       # w tiles (bf16, double-buffered)
                 + 2 * nc_pad * d_pad * 2   # key block
                 + bt * d_pad * 4           # f32 accumulator
                 + 2 * bt * nc_pad * 4)     # output block
    vmem_limit = int(min(config["vmem_cap"],
                         max(8 * 1024 * 1024, vmem_need + vmem_need // 2)))

    cost = pl.CostEstimate(
        flops=2 * b_pad * k_pad * d_pad + 2 * b_pad * d_pad * nc_pad,
        transcendentals=b_pad,  # one rsqrt per (padded) query row
        bytes_accessed=(b_pad * k_pad * 2                      # x read once
                        + n_batch_tiles * d_pad * k_pad * 2    # W re-stream
                        + nc_pad * d_pad * 2                   # key block
                        + b_pad * nc_pad * 4),                 # output write
    )

    def run(single_buffer_key):
        if single_buffer_key:
            # Resident key block (constant index map): no second buffer needed.
            key_spec = pl.BlockSpec((nc_pad, d_pad), lambda i, k: (0, 0),
                                    pipeline_mode=pl.Buffered(1))
        else:
            key_spec = pl.BlockSpec((nc_pad, d_pad), lambda i, k: (0, 0))
        return pl.pallas_call(
            kv_forward_kernel,
            out_shape=jax.ShapeDtypeStruct((b_pad, nc_pad), jnp.float32),
            grid_spec=pltpu.PrefetchScalarGridSpec(
                num_scalar_prefetch=0,
                grid=grid,
                in_specs=[
                    pl.BlockSpec((bt, tk), lambda i, k: (i, k)),
                    pl.BlockSpec((d_pad, tk), lambda i, k: (0, k)),
                    key_spec,
                ],
                out_specs=pl.BlockSpec((bt, nc_pad), lambda i, k: (i, 0)),
                scratch_shapes=[pltpu.VMEM((bt, d_pad), jnp.float32)],
            ),
            compiler_params=pltpu.CompilerParams(
                dimension_semantics=("parallel", "arbitrary"),
                vmem_limit_bytes=vmem_limit,
            ),
            cost_estimate=cost,
        )(xp, wp, kp)

    try:
        out = run(single_buffer_key=True)
    except Exception:
        # Fall back to default double-buffering if Buffered(1) is rejected.
        out = run(single_buffer_key=False)

    return out[:B, :NC]


def key_value_forward(x_nchw, w_embed, key_mem):
    """Convenience wrapper: prepares weights and runs the forward once."""
    wp, kp, geom, config = prepare_weights(w_embed, key_mem)
    return key_value_forward_prepared(x_nchw, wp, kp, geom, config)


def _reference(x_nchw, w_embed, key_mem):
    """Pure-JAX f32 reference mirroring the PyTorch forward."""
    B = x_nchw.shape[0]
    q = x_nchw.reshape(B, -1) @ w_embed.T
    q = q / jnp.maximum(jnp.linalg.norm(q, axis=1, keepdims=True), EPS)
    k = key_mem / jnp.maximum(jnp.linalg.norm(key_mem, axis=1, keepdims=True), EPS)
    return q @ k.T


if __name__ == "__main__":
    # Small deterministic shapes consistent with the module's forward:
    # inputs (B, C, H, W) images, dim_features D, num_classes prototypes.
    B, C, H, W = 2, 4, 16, 16
    D = 64            # args.dim_features
    NUM_CLASSES = 16  # args.num_classes (rows of key_mem)

    key = jax.random.PRNGKey(0)
    k_x, k_w, k_m = jax.random.split(key, 3)

    x = jax.random.normal(k_x, (B, C, H, W), dtype=jnp.float32)
    w_embed = 0.02 * jax.random.normal(k_w, (D, C * H * W), dtype=jnp.float32)
    key_mem = jax.random.normal(k_m, (NUM_CLASSES, D), dtype=jnp.float32)

    # Weight prep is hoisted: done once, reused across forward calls.
    wp, kp, geom, config = prepare_weights(w_embed, key_mem)
    out = key_value_forward_prepared(x, wp, kp, geom, config)
    out = jax.block_until_ready(out)

    ref = _reference(x, w_embed, key_mem)
    assert out.shape == (B, NUM_CLASSES)
    # bf16 MXU path (f32 accumulation / f32 norms) vs f32 reference.
    assert jnp.allclose(out, ref, atol=2e-2, rtol=2e-2), "mismatch vs reference"

    print("KERNEL_OK")
</pallas_src>

<mosaic_0001>
module attributes {stable_mosaic.version = 11 : i64} {
  func.func @kv_forward_kernel(%arg0: i32, %arg1: i32, %arg2: memref<16x512xbf16, #tpu.memory_space<vmem>>, %arg3: memref<128x512xbf16, #tpu.memory_space<vmem>>, %arg4: memref<128x128xbf16, #tpu.memory_space<vmem>>, %arg5: memref<16x128xf32, #tpu.memory_space<vmem>>, %arg6: memref<16x128xf32, #tpu.memory_space<vmem>>) attributes {dimension_semantics = [#tpu.dimension_semantics<parallel>, #tpu.dimension_semantics<arbitrary>], iteration_bounds = array<i64: 1, 2>, scalar_prefetch = 0 : i64, scratch_operands = 1 : i64, tpu.core_type = #tpu.core_type<tc>, window_params = [{transform_indices = @transform_0, window_bounds = array<i64: 16, 512>}, {transform_indices = @transform_1, window_bounds = array<i64: 128, 512>}, {pipeline_mode = #tpu.pipeline_mode<synchronous>, transform_indices = @transform_2, window_bounds = array<i64: 128, 128>}, {transform_indices = @transform_3, window_bounds = array<i64: 16, 128>}]} {
    %c0_i32 = arith.constant 0 : i32
    %0 = arith.cmpi eq, %arg1, %c0_i32 : i32
    %1 = arith.extui %0 : i1 to i32
    %c0_i32_0 = arith.constant 0 : i32
    %2 = arith.cmpi ne, %1, %c0_i32_0 : i32
    scf.if %2 {
      %cst_9 = arith.constant 0.000000e+00 : f32
      %12 = vector.broadcast %cst_9 : f32 to vector<16x128xf32>
      %c0_10 = arith.constant 0 : index
      %c0_11 = arith.constant 0 : index
      %13 = vector.load %arg6[%c0_10, %c0_11] : memref<16x128xf32, #tpu.memory_space<vmem>>, vector<16x128xf32>
      tpu.vector_store %arg6[%c0_10, %c0_11], %12 {strides = array<i32>} : memref<16x128xf32, #tpu.memory_space<vmem>>, vector<16x128xf32>,
    } else {
    }
    %c0 = arith.constant 0 : index
    %c0_1 = arith.constant 0 : index
    %3 = vector.load %arg6[%c0, %c0_1] : memref<16x128xf32, #tpu.memory_space<vmem>>, vector<16x128xf32>
    %c0_2 = arith.constant 0 : index
    %c0_3 = arith.constant 0 : index
    %4 = vector.load %arg2[%c0_2, %c0_3] : memref<16x512xbf16, #tpu.memory_space<vmem>>, vector<16x512xbf16>
    %c0_4 = arith.constant 0 : index
    %c0_5 = arith.constant 0 : index
    %5 = vector.load %arg3[%c0_4, %c0_5] : memref<128x512xbf16, #tpu.memory_space<vmem>>, vector<128x512xbf16>
    %cst = arith.constant dense<0.000000e+00> : vector<16x128xf32>
    %6 = tpu.matmul %4, %5, %cst {dimension_numbers = #tpu.dot_dimension_numbers<[1], [1], [0], [0], [0, 0, 1, 0], [], []>} : vector<16x512xbf16>, vector<128x512xbf16>, vector<16x128xf32> -> vector<16x128xf32>
    %7 = arith.addf %3, %6 : vector<16x128xf32>
    %c0_6 = arith.constant 0 : index
    %c0_7 = arith.constant 0 : index
    %8 = vector.load %arg6[%c0_6, %c0_7] : memref<16x128xf32, #tpu.memory_space<vmem>>, vector<16x128xf32>
    tpu.vector_store %arg6[%c0_6, %c0_7], %7 {strides = array<i32>} : memref<16x128xf32, #tpu.memory_space<vmem>>, vector<16x128xf32>,
    %c1_i32 = arith.constant 1 : i32
    %9 = arith.cmpi eq, %arg1, %c1_i32 : i32
    %10 = arith.extui %9 : i1 to i32
    %c0_i32_8 = arith.constant 0 : i32
    %11 = arith.cmpi ne, %10, %c0_i32_8 : i32
    scf.if %11 {
      %c0_9 = arith.constant 0 : index
      %c0_10 = arith.constant 0 : index
      %12 = vector.load %arg6[%c0_9, %c0_10] : memref<16x128xf32, #tpu.memory_space<vmem>>, vector<16x128xf32>
      %13 = arith.mulf %12, %12 : vector<16x128xf32>
      %cst_11 = arith.constant dense<0.000000e+00> : vector<16xf32>
      %14 = vector.multi_reduction <add>, %13, %cst_11 [1] : vector<16x128xf32> to vector<16xf32>
      %15 = vector.shape_cast %14 : vector<16xf32> to vector<16x1xf32>
      %cst_12 = arith.constant 1.000000e-24 : f32
      %16 = vector.broadcast %cst_12 : f32 to vector<16x1xf32>
      %17 = arith.maximumf %15, %16 : vector<16x1xf32>
      %18 = math.rsqrt %17 : vector<16x1xf32>
      %19 = arith.truncf %12 : vector<16x128xf32> to vector<16x128xbf16>
      %c0_13 = arith.constant 0 : index
      %c0_14 = arith.constant 0 : index
      %20 = vector.load %arg4[%c0_13, %c0_14] : memref<128x128xbf16, #tpu.memory_space<vmem>>, vector<128x128xbf16>
      %cst_15 = arith.constant dense<0.000000e+00> : vector<16x128xf32>
      %21 = tpu.matmul %19, %20, %cst_15 {dimension_numbers = #tpu.dot_dimension_numbers<[1], [1], [0], [0], [0, 0, 1, 0], [], []>} : vector<16x128xbf16>, vector<128x128xbf16>, vector<16x128xf32> -> vector<16x128xf32>
      %22 = vector.broadcast %18 : vector<16x1xf32> to vector<16x128xf32>
      %23 = arith.mulf %21, %22 : vector<16x128xf32>
      %c0_16 = arith.constant 0 : index
      %c0_17 = arith.constant 0 : index
      %24 = vector.load %arg5[%c0_16, %c0_17] : memref<16x128xf32, #tpu.memory_space<vmem>>, vector<16x128xf32>
      tpu.vector_store %arg5[%c0_16, %c0_17], %23 {strides = array<i32>} : memref<16x128xf32, #tpu.memory_space<vmem>>, vector<16x128xf32>,
    } else {
    }
    return
  }
  func.func @transform_0(%arg0: i32, %arg1: i32) -> (i32, i32) {
    %c0_i32 = arith.constant 0 : i32
    return %arg0, %arg1 : i32, i32
  }
  func.func @transform_1(%arg0: i32, %arg1: i32) -> (i32, i32) {
    %c0_i32 = arith.constant 0 : i32
    %c0_i32_0 = arith.constant 0 : i32
    return %c0_i32, %arg1 : i32, i32
  }
  func.func @transform_2(%arg0: i32, %arg1: i32) -> (i32, i32) {
    %c0_i32 = arith.constant 0 : i32
    %c0_i32_0 = arith.constant 0 : i32
    %c0_i32_1 = arith.constant 0 : i32
    return %c0_i32, %c0_i32_0 : i32, i32
  }
  func.func @transform_3(%arg0: i32, %arg1: i32) -> (i32, i32) {
    %c0_i32 = arith.constant 0 : i32
    %c0_i32_0 = arith.constant 0 : i32
    return %arg0, %c0_i32 : i32, i32
  }
}

module attributes {stable_mosaic.version = 11 : i64} {
  func.func @kv_forward_kernel(%arg0: i32, %arg1: i32, %arg2: memref<16x512xbf16, #tpu.memory_space<vmem>>, %arg3: memref<128x512xbf16, #tpu.memory_space<vmem>>, %arg4: memref<128x128xbf16, #tpu.memory_space<vmem>>, %arg5: memref<16x128xf32, #tpu.memory_space<vmem>>, %arg6: memref<16x128xf32, #tpu.memory_space<vmem>>) attributes {dimension_semantics = [#tpu.dimension_semantics<parallel>, #tpu.dimension_semantics<arbitrary>], iteration_bounds = array<i64: 1, 2>, scalar_prefetch = 0 : i64, scratch_operands = 1 : i64, tpu.core_type = #tpu.core_type<tc>, window_params = [{transform_indices = @transform_0, window_bounds = array<i64: 16, 512>}, {transform_indices = @transform_1, window_bounds = array<i64: 128, 512>}, {pipeline_mode = #tpu.pipeline_mode<synchronous>, transform_indices = @transform_2, window_bounds = array<i64: 128, 128>}, {transform_indices = @transform_3, window_bounds = array<i64: 16, 128>}]} {
    %c0_i32 = arith.constant 0 : i32
    %0 = arith.cmpi eq, %arg1, %c0_i32 : i32
    %1 = arith.extui %0 : i1 to i32
    %c0_i32_0 = arith.constant 0 : i32
    %2 = arith.cmpi ne, %1, %c0_i32_0 : i32
    scf.if %2 {
      %cst_9 = arith.constant 0.000000e+00 : f32
      %12 = vector.broadcast %cst_9 : f32 to vector<16x128xf32>
      %c0_10 = arith.constant 0 : index
      %c0_11 = arith.constant 0 : index
      %13 = vector.load %arg6[%c0_10, %c0_11] : memref<16x128xf32, #tpu.memory_space<vmem>>, vector<16x128xf32>
      tpu.vector_store %arg6[%c0_10, %c0_11], %12 {strides = array<i32>} : memref<16x128xf32, #tpu.memory_space<vmem>>, vector<16x128xf32>,
    } else {
    }
    %c0 = arith.constant 0 : index
    %c0_1 = arith.constant 0 : index
    %3 = vector.load %arg6[%c0, %c0_1] : memref<16x128xf32, #tpu.memory_space<vmem>>, vector<16x128xf32>
    %c0_2 = arith.constant 0 : index
    %c0_3 = arith.constant 0 : index
    %4 = vector.load %arg2[%c0_2, %c0_3] : memref<16x512xbf16, #tpu.memory_space<vmem>>, vector<16x512xbf16>
    %c0_4 = arith.constant 0 : index
    %c0_5 = arith.constant 0 : index
    %5 = vector.load %arg3[%c0_4, %c0_5] : memref<128x512xbf16, #tpu.memory_space<vmem>>, vector<128x512xbf16>
    %cst = arith.constant dense<0.000000e+00> : vector<16x128xf32>
    %6 = tpu.matmul %4, %5, %cst {dimension_numbers = #tpu.dot_dimension_numbers<[1], [1], [0], [0], [0, 0, 1, 0], [], []>} : vector<16x512xbf16>, vector<128x512xbf16>, vector<16x128xf32> -> vector<16x128xf32>
    %7 = arith.addf %3, %6 : vector<16x128xf32>
    %c0_6 = arith.constant 0 : index
    %c0_7 = arith.constant 0 : index
    %8 = vector.load %arg6[%c0_6, %c0_7] : memref<16x128xf32, #tpu.memory_space<vmem>>, vector<16x128xf32>
    tpu.vector_store %arg6[%c0_6, %c0_7], %7 {strides = array<i32>} : memref<16x128xf32, #tpu.memory_space<vmem>>, vector<16x128xf32>,
    %c1_i32 = arith.constant 1 : i32
    %9 = arith.cmpi eq, %arg1, %c1_i32 : i32
    %10 = arith.extui %9 : i1 to i32
    %c0_i32_8 = arith.constant 0 : i32
    %11 = arith.cmpi ne, %10, %c0_i32_8 : i32
    scf.if %11 {
      %c0_9 = arith.constant 0 : index
      %c0_10 = arith.constant 0 : index
      %12 = vector.load %arg6[%c0_9, %c0_10] : memref<16x128xf32, #tpu.memory_space<vmem>>, vector<16x128xf32>
      %13 = arith.mulf %12, %12 : vector<16x128xf32>
      %cst_11 = arith.constant dense<0.000000e+00> : vector<16xf32>
      %14 = vector.multi_reduction <add>, %13, %cst_11 [1] : vector<16x128xf32> to vector<16xf32>
      %15 = vector.shape_cast %14 : vector<16xf32> to vector<16x1xf32>
      %cst_12 = arith.constant 1.000000e-24 : f32
      %16 = vector.broadcast %cst_12 : f32 to vector<16x1xf32>
      %17 = arith.maximumf %15, %16 : vector<16x1xf32>
      %18 = math.rsqrt %17 : vector<16x1xf32>
      %19 = arith.truncf %12 : vector<16x128xf32> to vector<16x128xbf16>
      %c0_13 = arith.constant 0 : index
      %c0_14 = arith.constant 0 : index
      %20 = vector.load %arg4[%c0_13, %c0_14] : memref<128x128xbf16, #tpu.memory_space<vmem>>, vector<128x128xbf16>
      %cst_15 = arith.constant dense<0.000000e+00> : vector<16x128xf32>
      %21 = tpu.matmul %19, %20, %cst_15 {dimension_numbers = #tpu.dot_dimension_numbers<[1], [1], [0], [0], [0, 0, 1, 0], [], []>} : vector<16x128xbf16>, vector<128x128xbf16>, vector<16x128xf32> -> vector<16x128xf32>
      %22 = vector.broadcast %18 : vector<16x1xf32> to vector<16x128xf32>
      %23 = arith.mulf %21, %22 : vector<16x128xf32>
      %c0_16 = arith.constant 0 : index
      %c0_17 = arith.constant 0 : index
      %24 = vector.load %arg5[%c0_16, %c0_17] : memref<16x128xf32, #tpu.memory_space<vmem>>, vector<16x128xf32>
      tpu.vector_store %arg5[%c0_16, %c0_17], %23 {strides = array<i32>} : memref<16x128xf32, #tpu.memory_space<vmem>>, vector<16x128xf32>,
    } else {
    }
    return
  }
  func.func @transform_0(%arg0: i32, %arg1: i32) -> (i32, i32) {
    %c0_i32 = arith.constant 0 : i32
    return %arg0, %arg1 : i32, i32
  }
  func.func @transform_1(%arg0: i32, %arg1: i32) -> (i32, i32) {
    %c0_i32 = arith.constant 0 : i32
    %c0_i32_0 = arith.constant 0 : i32
    return %c0_i32, %arg1 : i32, i32
  }
  func.func @transform_2(%arg0: i32, %arg1: i32) -> (i32, i32) {
    %c0_i32 = arith.constant 0 : i32
    %c0_i32_0 = arith.constant 0 : i32
    %c0_i32_1 = arith.constant 0 : i32
    return %c0_i32, %c0_i32_0 : i32, i32
  }
  func.func @transform_3(%arg0: i32, %arg1: i32) -> (i32, i32) {
    %c0_i32 = arith.constant 0 : i32
    %c0_i32_0 = arith.constant 0 : i32
    return %arg0, %c0_i32 : i32, i32
  }
}

</mosaic_0001>

<llo_original>
// kernel: tpu_custom_call.1
$region0: #{tpu_custom_call.1}
  #allocation0 [shape = 'u32[]', space=smem, size = 0x4, offset = 0x4, fixed_abs, tag = 'smem constant byte address 0x4 - core index']
  #allocation1 [shape = 'u32[144,128]{1,0:T(1,128)}', space=vmem, size = 0x12000, scoped, tag = 'internal scratch']
  #allocation2 [shape = 'f32[16,128]{1,0:T(8,128)}', space=vmem, size = 0x2000, scoped, tag = 'scratch operand']
  %s0 = inlined_call_operand.hbm [shape: bf16[16,1024], index: 0, kind: input, shape index: {}]
  %s1 = inlined_call_operand.hbm [shape: bf16[128,1024], index: 1, kind: input, shape index: {}]
  %s2 = inlined_call_operand.hbm [shape: bf16[128,128], index: 2, kind: input, shape index: {}]
  %s3 = inlined_call_operand.hbm [shape: f32[16,128], index: 3, kind: output, shape index: {}]
  %s4 = sld [smem:[#allocation0]]
  $region65: #{tpu_custom_call.1} parent=0
    _
  %s6 = ssub.s32 1, %s4
  %s7 = scalar_select 0, %s6, %s4
  $region1: #{tpu_custom_call.1} parent=0
    #allocation3 [shape = 'u8[32768]{0}', space=vmem, size = 0x8000, scoped, tag = 'input window, operand 0']
    #allocation4 [shape = 's32[2]{0}', space=sflag, size = 0x8, scoped, tag = 'scoped memory for tpu_custom_call.1']
    #allocation5 [shape = 's32[2]{0}', space=sflag, size = 0x8, scoped, tag = 'scoped memory for tpu_custom_call.1']
    #allocation6 [shape = 'u8[262144]{0}', space=vmem, size = 0x40000, scoped, tag = 'input window, operand 1']
    #allocation7 [shape = 's32[2]{0}', space=sflag, size = 0x8, scoped, tag = 'scoped memory for tpu_custom_call.1']
    #allocation8 [shape = 'u8[32768]{0}', space=vmem, size = 0x8000, scoped, tag = 'input window, operand 2, single buffered']
    #allocation9 [shape = 'u8[8192]{0}', space=vmem, size = 0x2000, scoped, tag = 'output window, operand 0, single buffered']
    %8 = vsyncpa [#allocation4], 0
    %s9 = scalar_lea.sflag [#allocation4], 1
    %10 = vsyncpa %s9, 0
    %11 = vsyncpa [#allocation7], 0
    %s12 = scalar_lea.sflag [#allocation7], 1
    %13 = vsyncpa %s12, 0
    %14 = vsyncpa [#allocation5], 0
    loop: start=0, step=1, limit=4
    $region2: #{tpu_custom_call.1} parent=1 // loop_pre_header
      _
    $region3: #{tpu_custom_call.1} parent=1 // loop_header
      %s16 = sphi 0, %s20
      %p17 = scmp.ge.s32.totalorder %s16, 4
      %s23 = sphi 0, %s35
      %s24 = sphi 0, %s31
      %s25 = sphi 0, %s23
      %s26 = sphi 0, %s24
      %s27 = sphi 0, %s25
      %s28 = sphi 0, %s26
      %s40 = sphi 0, %s42
      %s43 = sphi 0, %s40
      %s44 = sphi 0, %s43
      %s60 = sphi 0, %s44
      %s66 = sphi 0, %s68
      %s69 = sphi 0, %s66
      %s70 = sphi 0, %s69
      %s86 = sphi 0, %s70
      %s90 = sphi 0, %s90
      %s92 = sphi 0, %s90
      %s93 = sphi 0, %s92
      %s107 = sphi 0, %s93
      %s113 = sphi 0, %s115
      %s116 = sphi 0, %s113
      %s117 = sphi 0, %s116
      %s133 = sphi 0, %s117
    $region4: #{tpu_custom_call.1} parent=1 // loop_header_branch
      %19 = sbr.rel (%p17) target = $region8
    $region5: #{tpu_custom_call.1} parent=1 // loop_body
      %s21 = ssub.s32 %s16, 1
      %s22 = ssub.s32 %s16, 2
      %s29 = sadd.s32 1, %s24
      %p30 = scmp.ge.s32.totalorder %s29, 2
      %s31 = scalar_select %p30, 0, %s29
      %s32 = sadd.s32 1, %s23
      %s33 = scalar_select %p30, %s32, %s23
      %p34 = scmp.ge.s32.totalorder %s33, 1
      %s35 = scalar_select %p34, 0, %s33
      %s36 = ssub.s32 %s23, %s35
      %s37 = ssub.s32 %s24, %s31
      %s38 = sor.u32 %s36, %s37
      %p39 = scmp.eq.s32.totalorder %s38, 0
      %s41 = sadd.s32 %s40, 1
      %s42 = scalar_select %p39, %s40, %s41
      %p45 = pneg %p39
      %p46 = scmp.eq.s32.totalorder %s16, 1
      %p47 = por %p45, %p46
      %p48 = scmp.ne.s32.totalorder %s40, %s43
      %p49 = scmp.eq.s32.totalorder %s16, 0
      %p50 = por %p48, %p49
      %p51 = scmp.ne.s32.totalorder %s40, %s43
      %p52 = scmp.eq.s32.totalorder %s21, 1
      %p53 = por %p51, %p52
      %p54 = scmp.ne.s32.totalorder %s43, %s44
      %p55 = scmp.eq.s32.totalorder %s21, 0
      %p56 = por %p54, %p55
      %p57 = scmp.ne.s32.totalorder %s43, %s44
      %p58 = scmp.eq.s32.totalorder %s22, 1
      %p59 = por %p57, %p58
      %p61 = scmp.ne.s32.totalorder %s44, %s60
      %p62 = scmp.eq.s32.totalorder %s22, 0
      %p63 = por %p61, %p62
      %s64 = ssub.s32 %s24, %s31
      %p65 = scmp.eq.s32.totalorder %s64, 0
      %s67 = sadd.s32 %s66, 1
      %s68 = scalar_select %p65, %s66, %s67
      %p71 = pneg %p65
      %p72 = scmp.eq.s32.totalorder %s16, 1
      %p73 = por %p71, %p72
      %p74 = scmp.ne.s32.totalorder %s66, %s69
      %p75 = scmp.eq.s32.totalorder %s16, 0
      %p76 = por %p74, %p75
      %p77 = scmp.ne.s32.totalorder %s66, %s69
      %p78 = scmp.eq.s32.totalorder %s21, 1
      %p79 = por %p77, %p78
      %p80 = scmp.ne.s32.totalorder %s69, %s70
      %p81 = scmp.eq.s32.totalorder %s21, 0
      %p82 = por %p80, %p81
      %p83 = scmp.ne.s32.totalorder %s69, %s70
      %p84 = scmp.eq.s32.totalorder %s22, 1
      %p85 = por %p83, %p84
      %p87 = scmp.ne.s32.totalorder %s70, %s86
      %p88 = scmp.eq.s32.totalorder %s22, 0
      %p89 = por %p87, %p88
      %s91 = sadd.s32 %s90, 1
      %p94 = scmp.eq.s32.totalorder %s16, 1
      %p95 = scmp.ne.s32.totalorder %s90, %s92
      %p96 = scmp.eq.s32.totalorder %s16, 0
      %p97 = por %p95, %p96
      %p98 = scmp.ne.s32.totalorder %s90, %s92
      %p99 = scmp.eq.s32.totalorder %s21, 1
      %p100 = por %p98, %p99
      %p101 = scmp.ne.s32.totalorder %s92, %s93
      %p102 = scmp.eq.s32.totalorder %s21, 0
      %p103 = por %p101, %p102
      %p104 = scmp.ne.s32.totalorder %s92, %s93
      %p105 = scmp.eq.s32.totalorder %s22, 1
      %p106 = por %p104, %p105
      %p108 = scmp.ne.s32.totalorder %s93, %s107
      %p109 = scmp.eq.s32.totalorder %s22, 0
      %p110 = por %p108, %p109
      %s111 = ssub.s32 %s23, %s35
      %p112 = scmp.eq.s32.totalorder %s111, 0
      %s114 = sadd.s32 %s113, 1
      %s115 = scalar_select %p112, %s113, %s114
      %p118 = pneg %p112
      %p119 = scmp.eq.s32.totalorder %s16, 1
      %p120 = por %p118, %p119
      %p121 = scmp.ne.s32.totalorder %s113, %s116
      %p122 = scmp.eq.s32.totalorder %s16, 0
      %p123 = por %p121, %p122
      %p124 = scmp.ne.s32.totalorder %s113, %s116
      %p125 = scmp.eq.s32.totalorder %s21, 1
      %p126 = por %p124, %p125
      %p127 = scmp.ne.s32.totalorder %s116, %s117
      %p128 = scmp.eq.s32.totalorder %s21, 0
      %p129 = por %p127, %p128
      %p130 = scmp.ne.s32.totalorder %s116, %s117
      %p131 = scmp.eq.s32.totalorder %s22, 1
      %p132 = por %p130, %p131
      %p134 = scmp.ne.s32.totalorder %s117, %s133
      %p135 = scmp.eq.s32.totalorder %s22, 0
      %p136 = por %p134, %p135
      %p137 = scmp.le.s32.totalorder 1, %s16
      %p138 = scmp.lt.s32.totalorder %s16, 3
      %p139 = pnand %p137, %p138
      %p140 = pneg %p139
      // Predicated region
      $region9: #{tpu_custom_call.1} parent=5 // pred_check
        _
      $region10: #{tpu_custom_call.1} parent=5 // pred_check_branch
        %142 = sbr.rel (%p139) target = $region12
      $region11: #{tpu_custom_call.1} parent=5 // pred_region
        %s143 = ssub.s32 %s16, 1
        // Predicated region
        $region13: #{tpu_custom_call.1} parent=11 // pred_check
          %p144 = pneg %p103
        $region14: #{tpu_custom_call.1} parent=11 // pred_check_branch
          %146 = sbr.rel (%p144) target = $region16
        $region15: #{tpu_custom_call.1} parent=11 // pred_region
          %s148 = ssub.s32 1024, 1024
          %149 = vsyncadd [#allocation7], %s148
          %s150 = sshll.u32 [#allocation8], 4
          %s151 = int_to_ptr.vmem [resolvable:$true] %s150
          %156 = dma.hbm_to_vmem [thread:$0]  %s2, 1024, %s151, [#allocation7], 64, 64, 4
        $region16: #{tpu_custom_call.1} parent=11 // pred_fallthru
          _
      $region12: #{tpu_custom_call.1} parent=5 // pred_fallthru
        _
      %p157 = scmp.lt.s32.totalorder %s16, 2
      // Predicated region
      $region17: #{tpu_custom_call.1} parent=5 // pred_check
        %p158 = pneg %p157
      $region18: #{tpu_custom_call.1} parent=5 // pred_check_branch
        %160 = sbr.rel (%p158) target = $region20
      $region19: #{tpu_custom_call.1} parent=5 // pred_region
        // Predicated region
        $region21: #{tpu_custom_call.1} parent=19 // pred_check
          %p161 = pneg %p50
        $region22: #{tpu_custom_call.1} parent=19 // pred_check_branch
          %163 = sbr.rel (%p161) target = $region24
        $region23: #{tpu_custom_call.1} parent=19 // pred_region
          %s164 = sand.u32 %s40, 1
          %s165 = scalar_lea.sflag [#allocation4], %s164
          %s166 = sand.u32 %s40, 1
          %s167 = smul.addr %s166, 32
          %s168 = scalar_lea.vmem [#allocation3], %s167
          %s169 = smul.u32 2, %s23
          %s170 = smul.u32 4, %s24
          %s172 = ssub.s32 512, 512
          %173 = vsyncadd %s165, %s172
          %s174 = smul.addr %s169, 8
          %s175 = sadd.s32 %s170, %s174
          %s176 = smul.addr %s175, 64
          %s177 = scalar_lea.hbm %s0, %s176
          %s178 = sshll.u32 %s168, 4
          %s179 = int_to_ptr.vmem [resolvable:$true] %s178
          %184 = dma.hbm_to_vmem [thread:$0]  %s177, 512, %s179, %s165, 512, 256, 16
        $region24: #{tpu_custom_call.1} parent=19 // pred_fallthru
          _
        // Predicated region
        $region25: #{tpu_custom_call.1} parent=19 // pred_check
          %p185 = pneg %p76
        $region26: #{tpu_custom_call.1} parent=19 // pred_check_branch
          %187 = sbr.rel (%p185) target = $region28
        $region27: #{tpu_custom_call.1} parent=19 // pred_region
          %s188 = sand.u32 %s16, 1
          %s189 = scalar_lea.sflag [#allocation7], %s188
          %s190 = sand.u32 %s66, 1
          %s191 = smul.addr %s190, 256
          %s192 = scalar_lea.vmem [#allocation6], %s191
          %s193 = smul.u32 4, %s24
          %s195 = ssub.s32 4096, 4096
          %196 = vsyncadd %s189, %s195
          %s197 = smul.addr %s193, 64
          %s198 = scalar_lea.hbm %s1, %s197
          %s199 = sshll.u32 %s192, 4
          %s200 = int_to_ptr.vmem [resolvable:$true] %s199
          %205 = dma.hbm_to_vmem [thread:$0]  %s198, 4096, %s200, %s189, 512, 256, 16
        $region28: #{tpu_custom_call.1} parent=19 // pred_fallthru
          _
      $region20: #{tpu_custom_call.1} parent=5 // pred_fallthru
        _
      %p206 = scmp.le.s32.totalorder 1, %s16
      %p207 = scmp.lt.s32.totalorder %s16, 3
      %p208 = pnand %p206, %p207
      %p209 = pneg %p208
      // Predicated region
      $region29: #{tpu_custom_call.1} parent=5 // pred_check
        _
      $region30: #{tpu_custom_call.1} parent=5 // pred_check_branch
        %211 = sbr.rel (%p208) target = $region32
      $region31: #{tpu_custom_call.1} parent=5 // pred_region
        %s212 = ssub.s32 %s16, 1
        %s213 = sand.u32 %s43, 1
        %s214 = scalar_lea.sflag [#allocation4], %s213
        %s215 = sand.u32 %s43, 1
        %s216 = smul.addr %s215, 32
        %s217 = scalar_lea.vmem [#allocation3], %s216
        // Predicated region
        $region33: #{tpu_custom_call.1} parent=31 // pred_check
          %p218 = pneg %p56
        $region34: #{tpu_custom_call.1} parent=31 // pred_check_branch
          %220 = sbr.rel (%p218) target = $region36
        $region35: #{tpu_custom_call.1} parent=31 // pred_region
          %221 = dma.done %s214, 512
        $region36: #{tpu_custom_call.1} parent=31 // pred_fallthru
          _
        %s222 = sand.u32 %s21, 1
        %s223 = scalar_lea.sflag [#allocation7], %s222
        %s224 = sand.u32 %s69, 1
        %s225 = smul.addr %s224, 256
        %s226 = scalar_lea.vmem [#allocation6], %s225
        // Predicated region
        $region37: #{tpu_custom_call.1} parent=31 // pred_check
          %p227 = pneg %p82
        $region38: #{tpu_custom_call.1} parent=31 // pred_check_branch
          %229 = sbr.rel (%p227) target = $region40
        $region39: #{tpu_custom_call.1} parent=31 // pred_region
          %230 = dma.done %s223, 4096
        $region40: #{tpu_custom_call.1} parent=31 // pred_fallthru
          _
        // Predicated region
        $region41: #{tpu_custom_call.1} parent=31 // pred_check
          %p231 = pneg %p103
        $region42: #{tpu_custom_call.1} parent=31 // pred_check_branch
          %233 = sbr.rel (%p231) target = $region44
        $region43: #{tpu_custom_call.1} parent=31 // pred_region
          %234 = dma.done [#allocation7], 1024
        $region44: #{tpu_custom_call.1} parent=31 // pred_fallthru
          _
        %s235 = sand.u32 %s43, 1
        %s236 = scalar_lea.sflag [#allocation4], %s235
        %s237 = sand.u32 %s43, 1
        %s238 = smul.addr %s237, 32
        %s239 = scalar_lea.vmem [#allocation3], %s238
        %p240 = pneg %p56
        %p241 = pneg %p53
        %s242 = sand.u32 %s21, 1
        %s243 = scalar_lea.sflag [#allocation7], %s242
        %s244 = sand.u32 %s69, 1
        %s245 = smul.addr %s244, 256
        %s246 = scalar_lea.vmem [#allocation6], %s245
        %p247 = pneg %p82
        %p248 = pneg %p79
        %p249 = pneg %p103
        %p250 = pneg %p100
        %p251 = pneg %p129
        %p252 = pneg %p126
        %s253 = smul.u32 2, %s25
        %s254 = smul.u32 4, %s26
        %s255 = smul.u32 4, %s26
        %s256 = smul.u32 2, %s25
        %p258 = scmp.eq.s32.totalorder %s26, 0
        // Predicated region
        $region45: #{tpu_custom_call.1} parent=31 // pred_check
          %p259 = pneg %p258
        $region46: #{tpu_custom_call.1} parent=31 // pred_check_branch
          %261 = sbr.rel (%p259) target = $region48
        $region47: #{tpu_custom_call.1} parent=31 // pred_region
          %262 = vst [vmem:[#allocation2] sm:$0xff] 0.0
          %263 = vst [vmem:[#allocation2 + $0x8] sm:$0xff] 0.0
        $region48: #{tpu_custom_call.1} parent=31 // pred_fallthru
          _
        %v264 = vld [vmem:[#allocation2] sm:$0xff]
        %v265 = vld [vmem:[#allocation2 + $0x8] sm:$0xff]
        %v266 = vld [vmem:[%s217] sm:$0xff]
        %v267 = vld [vmem:[%s217 + $0x8] sm:$0xff]
        %v268 = vld [vmem:[%s217 + $0x10] sm:$0xff]
        %v269 = vld [vmem:[%s217 + $0x18] sm:$0xff]
        %v270 = vld [vmem:[%s226] sm:$0xff]
        %v271 = vld [vmem:[%s226 + $0x8] sm:$0xff]
        %v272 = vld [vmem:[%s226 + $0x10] sm:$0xff]
        %v273 = vld [vmem:[%s226 + $0x18] sm:$0xff]
        %v274 = vld [vmem:[%s226 + $0x20] sm:$0xff]
        %v275 = vld [vmem:[%s226 + $0x28] sm:$0xff]
        %v276 = vld [vmem:[%s226 + $0x30] sm:$0xff]
        %v277 = vld [vmem:[%s226 + $0x38] sm:$0xff]
        %v278 = vld [vmem:[%s226 + $0x40] sm:$0xff]
        %v279 = vld [vmem:[%s226 + $0x48] sm:$0xff]
        %v280 = vld [vmem:[%s226 + $0x50] sm:$0xff]
        %v281 = vld [vmem:[%s226 + $0x58] sm:$0xff]
        %v282 = vld [vmem:[%s226 + $0x60] sm:$0xff]
        %v283 = vld [vmem:[%s226 + $0x68] sm:$0xff]
        %v284 = vld [vmem:[%s226 + $0x70] sm:$0xff]
        %v285 = vld [vmem:[%s226 + $0x78] sm:$0xff]
        %v286 = vld [vmem:[%s226 + $0x80] sm:$0xff]
        %v287 = vld [vmem:[%s226 + $0x88] sm:$0xff]
        %v288 = vld [vmem:[%s226 + $0x90] sm:$0xff]
        %v289 = vld [vmem:[%s226 + $0x98] sm:$0xff]
        %v290 = vld [vmem:[%s226 + $0xa0] sm:$0xff]
        %v291 = vld [vmem:[%s226 + $0xa8] sm:$0xff]
        %v292 = vld [vmem:[%s226 + $0xb0] sm:$0xff]
        %v293 = vld [vmem:[%s226 + $0xb8] sm:$0xff]
        %v294 = vld [vmem:[%s226 + $0xc0] sm:$0xff]
        %v295 = vld [vmem:[%s226 + $0xc8] sm:$0xff]
        %v296 = vld [vmem:[%s226 + $0xd0] sm:$0xff]
        %v297 = vld [vmem:[%s226 + $0xd8] sm:$0xff]
        %v298 = vld [vmem:[%s226 + $0xe0] sm:$0xff]
        %v299 = vld [vmem:[%s226 + $0xe8] sm:$0xff]
        %v300 = vld [vmem:[%s226 + $0xf0] sm:$0xff]
        %v301 = vld [vmem:[%s226 + $0xf8] sm:$0xff]
        %v306 = vunpack.c.l.b16 %v266
        %v307 = vunpack.c.h.b16 %v266
        %v308 = vunpack.c.l.b16 %v267
        %v309 = vunpack.c.h.b16 %v267
        %v310 = vunpack.c.l.b16 %v268
        %v311 = vunpack.c.h.b16 %v268
        %v312 = vunpack.c.l.b16 %v269
        %v313 = vunpack.c.h.b16 %v269
        %v314 = vpack.c.b16 %v310, %v306
        %v315 = vpack.c.b16 %v311, %v307
        %v316 = vpack.c.b16 %v312, %v308
        %v317 = vpack.c.b16 %v313, %v309
        %v354 = vunpack.c.l.b16 %v270
        %v355 = vunpack.c.h.b16 %v270
        %v356 = vunpack.c.l.b16 %v271
        %v357 = vunpack.c.h.b16 %v271
        %v358 = vunpack.c.l.b16 %v272
        %v359 = vunpack.c.h.b16 %v272
        %v360 = vunpack.c.l.b16 %v273
        %v361 = vunpack.c.h.b16 %v273
        %v362 = vunpack.c.l.b16 %v274
        %v363 = vunpack.c.h.b16 %v274
        %v364 = vunpack.c.l.b16 %v275
        %v365 = vunpack.c.h.b16 %v275
        %v366 = vunpack.c.l.b16 %v276
        %v367 = vunpack.c.h.b16 %v276
        %v368 = vunpack.c.l.b16 %v277
        %v369 = vunpack.c.h.b16 %v277
        %v370 = vunpack.c.l.b16 %v278
        %v371 = vunpack.c.h.b16 %v278
        %v372 = vunpack.c.l.b16 %v279
        %v373 = vunpack.c.h.b16 %v279
        %v374 = vunpack.c.l.b16 %v280
        %v375 = vunpack.c.h.b16 %v280
        %v376 = vunpack.c.l.b16 %v281
        %v377 = vunpack.c.h.b16 %v281
        %v378 = vunpack.c.l.b16 %v282
        %v379 = vunpack.c.h.b16 %v282
        %v380 = vunpack.c.l.b16 %v283
        %v381 = vunpack.c.h.b16 %v283
        %v382 = vunpack.c.l.b16 %v284
        %v383 = vunpack.c.h.b16 %v284
        %v384 = vunpack.c.l.b16 %v285
        %v385 = vunpack.c.h.b16 %v285
        %v386 = vunpack.c.l.b16 %v286
        %v387 = vunpack.c.h.b16 %v286
        %v388 = vunpack.c.l.b16 %v287
        %v389 = vunpack.c.h.b16 %v287
        %v390 = vunpack.c.l.b16 %v288
        %v391 = vunpack.c.h.b16 %v288
        %v392 = vunpack.c.l.b16 %v289
        %v393 = vunpack.c.h.b16 %v289
        %v394 = vunpack.c.l.b16 %v290
        %v395 = vunpack.c.h.b16 %v290
        %v396 = vunpack.c.l.b16 %v291
        %v397 = vunpack.c.h.b16 %v291
        %v398 = vunpack.c.l.b16 %v292
        %v399 = vunpack.c.h.b16 %v292
        %v400 = vunpack.c.l.b16 %v293
        %v401 = vunpack.c.h.b16 %v293
        %v402 = vunpack.c.l.b16 %v294
        %v403 = vunpack.c.h.b16 %v294
        %v404 = vunpack.c.l.b16 %v295
        %v405 = vunpack.c.h.b16 %v295
        %v406 = vunpack.c.l.b16 %v296
        %v407 = vunpack.c.h.b16 %v296
        %v408 = vunpack.c.l.b16 %v297
        %v409 = vunpack.c.h.b16 %v297
        %v410 = vunpack.c.l.b16 %v298
        %v411 = vunpack.c.h.b16 %v298
        %v412 = vunpack.c.l.b16 %v299
        %v413 = vunpack.c.h.b16 %v299
        %v414 = vunpack.c.l.b16 %v300
        %v415 = vunpack.c.h.b16 %v300
        %v416 = vunpack.c.l.b16 %v301
        %v417 = vunpack.c.h.b16 %v301
        %v418 = vpack.c.b16 %v358, %v354
        %v419 = vpack.c.b16 %v359, %v355
        %v420 = vpack.c.b16 %v360, %v356
        %v421 = vpack.c.b16 %v361, %v357
        %v422 = vpack.c.b16 %v366, %v362
        %v423 = vpack.c.b16 %v367, %v363
        %v424 = vpack.c.b16 %v368, %v364
        %v425 = vpack.c.b16 %v369, %v365
        %v426 = vpack.c.b16 %v374, %v370
        %v427 = vpack.c.b16 %v375, %v371
        %v428 = vpack.c.b16 %v376, %v372
        %v429 = vpack.c.b16 %v377, %v373
        %v430 = vpack.c.b16 %v382, %v378
        %v431 = vpack.c.b16 %v383, %v379
        %v432 = vpack.c.b16 %v384, %v380
        %v433 = vpack.c.b16 %v385, %v381
        %v434 = vpack.c.b16 %v390, %v386
        %v435 = vpack.c.b16 %v391, %v387
        %v436 = vpack.c.b16 %v392, %v388
        %v437 = vpack.c.b16 %v393, %v389
        %v438 = vpack.c.b16 %v398, %v394
        %v439 = vpack.c.b16 %v399, %v395
        %v440 = vpack.c.b16 %v400, %v396
        %v441 = vpack.c.b16 %v401, %v397
        %v442 = vpack.c.b16 %v406, %v402
        %v443 = vpack.c.b16 %v407, %v403
        %v444 = vpack.c.b16 %v408, %v404
        %v445 = vpack.c.b16 %v409, %v405
        %v446 = vpack.c.b16 %v414, %v410
        %v447 = vpack.c.b16 %v415, %v411
        %v448 = vpack.c.b16 %v416, %v412
        %v449 = vpack.c.b16 %v417, %v413
        %482 = vmatprep.subr.bf16.mxu0 %v447
        %483 = vmatpush1.bf16.xpose.msra.mxu0 %v446
        %484 = vmatprep.subr.bf16.mxu0 %v443
        %485 = vmatpush1.bf16.xpose.msra.mxu0 %v442
        %486 = vmatprep.subr.bf16.mxu0 %v439
        %487 = vmatpush1.bf16.xpose.msra.mxu0 %v438
        %488 = vmatprep.subr.bf16.mxu0 %v435
        %489 = vmatpush1.bf16.xpose.msra.mxu0 %v434
        %490 = vmatprep.subr.bf16.mxu0 %v431
        %491 = vmatpush1.bf16.xpose.msra.mxu0 %v430
        %492 = vmatprep.subr.bf16.mxu0 %v427
        %493 = vmatpush1.bf16.xpose.msra.mxu0 %v426
        %494 = vmatprep.subr.bf16.mxu0 %v423
        %495 = vmatpush1.bf16.xpose.msra.mxu0 %v422
        %496 = vmatprep.subr.bf16.mxu0 %v419
        %497 = vmatpush1.bf16.xpose.msra.mxu0 %v418
        %498 = vmatprep.subr.bf16.mxu0 0
        %499 = vmatpush2.bf16.xpose.msra.mxu0 0
        %500 = vmatprep.subr.bf16.mxu0 0
        %501 = vmatpush2.bf16.xpose.msra.mxu0 0
        %502 = vmatprep.subr.bf16.mxu0 0
        %503 = vmatpush2.bf16.xpose.msra.mxu0 0
        %504 = vmatprep.subr.bf16.mxu0 0
        %505 = vmatpush2.bf16.xpose.msra.mxu0 0
        %506 = vmatprep.subr.bf16.mxu0 0
        %507 = vmatpush2.bf16.xpose.msra.mxu0 0
        %508 = vmatprep.subr.bf16.mxu0 0
        %509 = vmatpush2.bf16.xpose.msra.mxu0 0
        %510 = vmatprep.subr.bf16.mxu0 0
        %511 = vmatpush2.bf16.xpose.msra.mxu0 0
        %512 = vmatprep.subr.bf16.mxu0 0
        %513 = vmatpush2.bf16.xpose.msra.mxu0 0
        %514 = vmatprep.mubr.bf16.mxu0 %v315
        %515 = vmatmul.mubr.bf16.gmra.mxu0 %v314
        %v516 = vpop.f32.mrf.mxu0
        %v517 = vadd.f32 0.0, %v516
        %v518 = vpop.f32.mrf.mxu0
        %v519 = vpop.f32.mrf.mxu0
        %v520 = vadd.f32 0.0, %v519
        %v521 = vpop.f32.mrf.mxu0
        %522 = vdwg.mxu0
        %523 = vmatprep.subr.bf16.mxu0 %v449
        %524 = vmatpush1.bf16.xpose.msra.mxu0 %v448
        %525 = vmatprep.subr.bf16.mxu0 %v445
        %526 = vmatpush1.bf16.xpose.msra.mxu0 %v444
        %527 = vmatprep.subr.bf16.mxu0 %v441
        %528 = vmatpush1.bf16.xpose.msra.mxu0 %v440
        %529 = vmatprep.subr.bf16.mxu0 %v437
        %530 = vmatpush1.bf16.xpose.msra.mxu0 %v436
        %531 = vmatprep.subr.bf16.mxu0 %v433
        %532 = vmatpush1.bf16.xpose.msra.mxu0 %v432
        %533 = vmatprep.subr.bf16.mxu0 %v429
        %534 = vmatpush1.bf16.xpose.msra.mxu0 %v428
        %535 = vmatprep.subr.bf16.mxu0 %v425
        %536 = vmatpush1.bf16.xpose.msra.mxu0 %v424
        %537 = vmatprep.subr.bf16.mxu0 %v421
        %538 = vmatpush1.bf16.xpose.msra.mxu0 %v420
        %539 = vmatprep.subr.bf16.mxu0 0
        %540 = vmatpush2.bf16.xpose.msra.mxu0 0
        %541 = vmatprep.subr.bf16.mxu0 0
        %542 = vmatpush2.bf16.xpose.msra.mxu0 0
        %543 = vmatprep.subr.bf16.mxu0 0
        %544 = vmatpush2.bf16.xpose.msra.mxu0 0
        %545 = vmatprep.subr.bf16.mxu0 0
        %546 = vmatpush2.bf16.xpose.msra.mxu0 0
        %547 = vmatprep.subr.bf16.mxu0 0
        %548 = vmatpush2.bf16.xpose.msra.mxu0 0
        %549 = vmatprep.subr.bf16.mxu0 0
        %550 = vmatpush2.bf16.xpose.msra.mxu0 0
        %551 = vmatprep.subr.bf16.mxu0 0
        %552 = vmatpush2.bf16.xpose.msra.mxu0 0
        %553 = vmatprep.subr.bf16.mxu0 0
        %554 = vmatpush2.bf16.xpose.msra.mxu0 0
        %555 = vmatprep.mubr.bf16.mxu0 %v317
        %556 = vmatmul.mubr.bf16.gmra.mxu0 %v316
        %v557 = vpop.f32.mrf.mxu0
        %v558 = vadd.f32 %v517, %v557
        %v559 = vpop.f32.mrf.mxu0
        %v560 = vpop.f32.mrf.mxu0
        %v561 = vadd.f32 %v520, %v560
        %v562 = vpop.f32.mrf.mxu0
        %563 = vdwg.mxu0
        %v564 = vadd.f32 %v264, %v558
        %v565 = vadd.f32 %v265, %v561
        %566 = vst [vmem:[#allocation2] sm:$0xff] %v564
        %567 = vst [vmem:[#allocation2 + $0x8] sm:$0xff] %v565
        %p568 = scmp.eq.s32.totalorder %s26, 1
        // Predicated region
        $region49: #{tpu_custom_call.1} parent=31 // pred_check
          %p569 = pneg %p568
        $region50: #{tpu_custom_call.1} parent=31 // pred_check_branch
          %571 = sbr.rel (%p569) target = $region52
        $region51: #{tpu_custom_call.1} parent=31 // pred_region
          %v572 = vld [vmem:[#allocation2] sm:$0xff]
          %v573 = vld [vmem:[#allocation2 + $0x8] sm:$0xff]
          %v574 = vmul.f32 %v572, %v572
          %v575 = vmul.f32 %v573, %v573
          %576 = vadd.xlane.f32.xlu0 %v574
          %v577 = vpop.xlane.xlu0 %576
          %578 = vadd.xlane.f32.xlu0 %v575
          %v579 = vpop.xlane.xlu0 %578
          %v580 = vmax.f32 %v577, 1e-24
          %v581 = vmax.f32 %v579, 1e-24
          %v582 = vrsqrt.pop %v580
          %v583 = vrsqrt.pop %v581
          %v584 = vpack.c.bf16 %v573, %v572
          %v585 = vld [vmem:[#allocation8] sm:$0xf]
          %v586 = vld [vmem:[#allocation8 + $0x4] sm:$0xf]
          %v587 = vld [vmem:[#allocation8 + $0x8] sm:$0xf]
          %v588 = vld [vmem:[#allocation8 + $0xc] sm:$0xf]
          %v589 = vld [vmem:[#allocation8 + $0x10] sm:$0xf]
          %v590 = vld [vmem:[#allocation8 + $0x14] sm:$0xf]
          %v591 = vld [vmem:[#allocation8 + $0x18] sm:$0xf]
          %v592 = vld [vmem:[#allocation8 + $0x1c] sm:$0xf]
          %v593 = vld [vmem:[#allocation8 + $0x20] sm:$0xf]
          %v594 = vld [vmem:[#allocation8 + $0x24] sm:$0xf]
          %v595 = vld [vmem:[#allocation8 + $0x28] sm:$0xf]
          %v596 = vld [vmem:[#allocation8 + $0x2c] sm:$0xf]
          %v597 = vld [vmem:[#allocation8 + $0x30] sm:$0xf]
          %v598 = vld [vmem:[#allocation8 + $0x34] sm:$0xf]
          %v599 = vld [vmem:[#allocation8 + $0x38] sm:$0xf]
          %v600 = vld [vmem:[#allocation8 + $0x3c] sm:$0xf]
          %v617 = vunpack.c.l.b16 %v585
          %v618 = vunpack.c.l.b16 %v586
          %v619 = vunpack.c.l.b16 %v587
          %v620 = vunpack.c.l.b16 %v588
          %v621 = vunpack.c.l.b16 %v589
          %v622 = vunpack.c.l.b16 %v590
          %v623 = vunpack.c.l.b16 %v591
          %v624 = vunpack.c.l.b16 %v592
          %v625 = vunpack.c.l.b16 %v593
          %v626 = vunpack.c.l.b16 %v594
          %v627 = vunpack.c.l.b16 %v595
          %v628 = vunpack.c.l.b16 %v596
          %v629 = vunpack.c.l.b16 %v597
          %v630 = vunpack.c.l.b16 %v598
          %v631 = vunpack.c.l.b16 %v599
          %v632 = vunpack.c.l.b16 %v600
          %v633 = vpack.c.b16 %v618, %v617
          %v634 = vpack.c.b16 %v620, %v619
          %v635 = vpack.c.b16 %v622, %v621
          %v636 = vpack.c.b16 %v624, %v623
          %v637 = vpack.c.b16 %v626, %v625
          %v638 = vpack.c.b16 %v628, %v627
          %v639 = vpack.c.b16 %v630, %v629
          %v640 = vpack.c.b16 %v632, %v631
          %649 = vmatprep.subr.bf16.mxu0 0
          %650 = vmatpush1.bf16.xpose.msra.mxu0 %v640
          %651 = vmatprep.subr.bf16.mxu0 0
          %652 = vmatpush1.bf16.xpose.msra.mxu0 %v639
          %653 = vmatprep.subr.bf16.mxu0 0
          %654 = vmatpush1.bf16.xpose.msra.mxu0 %v638
          %655 = vmatprep.subr.bf16.mxu0 0
          %656 = vmatpush1.bf16.xpose.msra.mxu0 %v637
          %657 = vmatprep.subr.bf16.mxu0 0
          %658 = vmatpush1.bf16.xpose.msra.mxu0 %v636
          %659 = vmatprep.subr.bf16.mxu0 0
          %660 = vmatpush1.bf16.xpose.msra.mxu0 %v635
          %661 = vmatprep.subr.bf16.mxu0 0
          %662 = vmatpush1.bf16.xpose.msra.mxu0 %v634
          %663 = vmatprep.subr.bf16.mxu0 0
          %664 = vmatpush1.bf16.xpose.msra.mxu0 %v633
          %665 = vmatprep.subr.bf16.mxu0 0
          %666 = vmatpush2.bf16.xpose.msra.mxu0 0
          %667 = vmatprep.subr.bf16.mxu0 0
          %668 = vmatpush2.bf16.xpose.msra.mxu0 0
          %669 = vmatprep.subr.bf16.mxu0 0
          %670 = vmatpush2.bf16.xpose.msra.mxu0 0
          %671 = vmatprep.subr.bf16.mxu0 0
          %672 = vmatpush2.bf16.xpose.msra.mxu0 0
          %673 = vmatprep.subr.bf16.mxu0 0
          %674 = vmatpush2.bf16.xpose.msra.mxu0 0
          %675 = vmatprep.subr.bf16.mxu0 0
          %676 = vmatpush2.bf16.xpose.msra.mxu0 0
          %677 = vmatprep.subr.bf16.mxu0 0
          %678 = vmatpush2.bf16.xpose.msra.mxu0 0
          %679 = vmatprep.subr.bf16.mxu0 0
          %680 = vmatpush2.bf16.xpose.msra.mxu0 0
          %681 = vmatprep.mubr.bf16.mxu0 0
          %682 = vmatmul.mubr.bf16.gmra.mxu0 %v584
          %v683 = vpop.f32.mrf.mxu0
          %v684 = vadd.f32 0.0, %v683
          %v685 = vpop.f32.mrf.mxu0
          %v686 = vpop.f32.mrf.mxu0
          %v687 = vadd.f32 0.0, %v686
          %v688 = vpop.f32.mrf.mxu0
          %689 = vdwg.mxu0
          %v690 = vmul.f32 %v684, %v582
          %v691 = vmul.f32 %v687, %v583
          %692 = vst [vmem:[#allocation9] sm:$0xff] %v690
          %693 = vst [vmem:[#allocation9 + $0x8] sm:$0xff] %v691
        $region52: #{tpu_custom_call.1} parent=31 // pred_fallthru
          _
        // Predicated region
        $region53: #{tpu_custom_call.1} parent=31 // pred_check
          %p694 = pneg %p126
        $region54: #{tpu_custom_call.1} parent=31 // pred_check_branch
          %696 = sbr.rel (%p694) target = $region56
        $region55: #{tpu_custom_call.1} parent=31 // pred_region
          %s697 = smul.u32 2, %s25
          %s699 = ssub.s32 256, 256
          %700 = vsyncadd [#allocation5], %s699
          %s701 = smul.addr %s697, 128
          %s702 = scalar_lea.hbm %s3, %s701
          %s703 = sshll.u32 [#allocation9], 4
          %s704 = int_to_ptr.vmem [resolvable:$true] %s703
          %709 = dma.vmem_to_hbm [thread:$0]  %s704, 256, %s702, [#allocation5], 128, 128, 8
        $region56: #{tpu_custom_call.1} parent=31 // pred_fallthru
          _
        // Predicated region
        $region57: #{tpu_custom_call.1} parent=31 // pred_check
          %p710 = pneg %p126
        $region58: #{tpu_custom_call.1} parent=31 // pred_check_branch
          %712 = sbr.rel (%p710) target = $region60
        $region59: #{tpu_custom_call.1} parent=31 // pred_region
          %713 = dma.done [#allocation5], 256
        $region60: #{tpu_custom_call.1} parent=31 // pred_fallthru
          _
      $region32: #{tpu_custom_call.1} parent=5 // pred_fallthru
        _
      %p714 = scmp.le.s32.totalorder 2, %s16
      // Predicated region
      $region61: #{tpu_custom_call.1} parent=5 // pred_check
        %p715 = pneg %p714
      $region62: #{tpu_custom_call.1} parent=5 // pred_check_branch
        %717 = sbr.rel (%p715) target = $region64
      $region63: #{tpu_custom_call.1} parent=5 // pred_region
        %s718 = ssub.s32 %s16, 2
      $region64: #{tpu_custom_call.1} parent=5 // pred_fallthru
        _
    $region6: #{tpu_custom_call.1} parent=1 // loop_footer
      %s20 = sadd.s32 1, %s16
    $region7: #{tpu_custom_call.1} parent=1 // loop_footer_branch
      %15 = sbr.rel target = $region3
    $region8: #{tpu_custom_call.1} parent=1 // loop_exit
      _
    %719 = vsyncpa [#allocation4], 1
    %s720 = scalar_lea.sflag [#allocation4], 1
    %721 = vsyncpa %s720, 1
    %722 = vsyncpa [#allocation7], 1
    %s723 = scalar_lea.sflag [#allocation7], 1
    %724 = vsyncpa %s723, 1
    %725 = vsyncpa [#allocation5], 1
    %s726 = scalar_lea.sflag [#allocation5], 1
    %727 = vsyncpa %s726, 1

// kernel: tpu_custom_call.1
$region0: #{tpu_custom_call.1}
  #allocation0 [shape = 'u32[]', space=smem, size = 0x4, offset = 0x4, fixed_abs, tag = 'smem constant byte address 0x4 - core index']
  #allocation1 [shape = 'u32[144,128]{1,0:T(1,128)}', space=vmem, size = 0x12000, scoped, tag = 'internal scratch']
  #allocation2 [shape = 'f32[16,128]{1,0:T(8,128)}', space=vmem, size = 0x2000, scoped, tag = 'scratch operand']
  %s0 = inlined_call_operand.hbm [shape: bf16[16,1024], index: 0, kind: input, shape index: {}]
  %s1 = inlined_call_operand.hbm [shape: bf16[128,1024], index: 1, kind: input, shape index: {}]
  %s2 = inlined_call_operand.hbm [shape: bf16[128,128], index: 2, kind: input, shape index: {}]
  %s3 = inlined_call_operand.hbm [shape: f32[16,128], index: 3, kind: output, shape index: {}]
  %s4 = sld [smem:[#allocation0]]
  $region65: #{tpu_custom_call.1} parent=0
    _
  %s6 = ssub.s32 1, %s4
  %s7 = scalar_select 0, %s6, %s4
  $region1: #{tpu_custom_call.1} parent=0
    #allocation3 [shape = 'u8[32768]{0}', space=vmem, size = 0x8000, scoped, tag = 'input window, operand 0']
    #allocation4 [shape = 's32[2]{0}', space=sflag, size = 0x8, scoped, tag = 'scoped memory for tpu_custom_call.1']
    #allocation5 [shape = 's32[2]{0}', space=sflag, size = 0x8, scoped, tag = 'scoped memory for tpu_custom_call.1']
    #allocation6 [shape = 'u8[262144]{0}', space=vmem, size = 0x40000, scoped, tag = 'input window, operand 1']
    #allocation7 [shape = 's32[2]{0}', space=sflag, size = 0x8, scoped, tag = 'scoped memory for tpu_custom_call.1']
    #allocation8 [shape = 'u8[32768]{0}', space=vmem, size = 0x8000, scoped, tag = 'input window, operand 2, single buffered']
    #allocation9 [shape = 'u8[8192]{0}', space=vmem, size = 0x2000, scoped, tag = 'output window, operand 0, single buffered']
    %8 = vsyncpa [#allocation4], 0
    %s9 = scalar_lea.sflag [#allocation4], 1
    %10 = vsyncpa %s9, 0
    %11 = vsyncpa [#allocation7], 0
    %s12 = scalar_lea.sflag [#allocation7], 1
    %13 = vsyncpa %s12, 0
    %14 = vsyncpa [#allocation5], 0
    loop: start=0, step=1, limit=4
    $region2: #{tpu_custom_call.1} parent=1 // loop_pre_header
      _
    $region3: #{tpu_custom_call.1} parent=1 // loop_header
      %s16 = sphi 0, %s20
      %p17 = scmp.ge.s32.totalorder %s16, 4
      %s23 = sphi 0, %s35
      %s24 = sphi 0, %s31
      %s25 = sphi 0, %s23
      %s26 = sphi 0, %s24
      %s27 = sphi 0, %s25
      %s28 = sphi 0, %s26
      %s40 = sphi 0, %s42
      %s43 = sphi 0, %s40
      %s44 = sphi 0, %s43
      %s60 = sphi 0, %s44
      %s66 = sphi 0, %s68
      %s69 = sphi 0, %s66
      %s70 = sphi 0, %s69
      %s86 = sphi 0, %s70
      %s90 = sphi 0, %s90
      %s92 = sphi 0, %s90
      %s93 = sphi 0, %s92
      %s107 = sphi 0, %s93
      %s113 = sphi 0, %s115
      %s116 = sphi 0, %s113
      %s117 = sphi 0, %s116
      %s133 = sphi 0, %s117
    $region4: #{tpu_custom_call.1} parent=1 // loop_header_branch
      %19 = sbr.rel (%p17) target = $region8
    $region5: #{tpu_custom_call.1} parent=1 // loop_body
      %s21 = ssub.s32 %s16, 1
      %s22 = ssub.s32 %s16, 2
      %s29 = sadd.s32 1, %s24
      %p30 = scmp.ge.s32.totalorder %s29, 2
      %s31 = scalar_select %p30, 0, %s29
      %s32 = sadd.s32 1, %s23
      %s33 = scalar_select %p30, %s32, %s23
      %p34 = scmp.ge.s32.totalorder %s33, 1
      %s35 = scalar_select %p34, 0, %s33
      %s36 = ssub.s32 %s23, %s35
      %s37 = ssub.s32 %s24, %s31
      %s38 = sor.u32 %s36, %s37
      %p39 = scmp.eq.s32.totalorder %s38, 0
      %s41 = sadd.s32 %s40, 1
      %s42 = scalar_select %p39, %s40, %s41
      %p45 = pneg %p39
      %p46 = scmp.eq.s32.totalorder %s16, 1
      %p47 = por %p45, %p46
      %p48 = scmp.ne.s32.totalorder %s40, %s43
      %p49 = scmp.eq.s32.totalorder %s16, 0
      %p50 = por %p48, %p49
      %p51 = scmp.ne.s32.totalorder %s40, %s43
      %p52 = scmp.eq.s32.totalorder %s21, 1
      %p53 = por %p51, %p52
      %p54 = scmp.ne.s32.totalorder %s43, %s44
      %p55 = scmp.eq.s32.totalorder %s21, 0
      %p56 = por %p54, %p55
      %p57 = scmp.ne.s32.totalorder %s43, %s44
      %p58 = scmp.eq.s32.totalorder %s22, 1
      %p59 = por %p57, %p58
      %p61 = scmp.ne.s32.totalorder %s44, %s60
      %p62 = scmp.eq.s32.totalorder %s22, 0
      %p63 = por %p61, %p62
      %s64 = ssub.s32 %s24, %s31
      %p65 = scmp.eq.s32.totalorder %s64, 0
      %s67 = sadd.s32 %s66, 1
      %s68 = scalar_select %p65, %s66, %s67
      %p71 = pneg %p65
      %p72 = scmp.eq.s32.totalorder %s16, 1
      %p73 = por %p71, %p72
      %p74 = scmp.ne.s32.totalorder %s66, %s69
      %p75 = scmp.eq.s32.totalorder %s16, 0
      %p76 = por %p74, %p75
      %p77 = scmp.ne.s32.totalorder %s66, %s69
      %p78 = scmp.eq.s32.totalorder %s21, 1
      %p79 = por %p77, %p78
      %p80 = scmp.ne.s32.totalorder %s69, %s70
      %p81 = scmp.eq.s32.totalorder %s21, 0
      %p82 = por %p80, %p81
      %p83 = scmp.ne.s32.totalorder %s69, %s70
      %p84 = scmp.eq.s32.totalorder %s22, 1
      %p85 = por %p83, %p84
      %p87 = scmp.ne.s32.totalorder %s70, %s86
      %p88 = scmp.eq.s32.totalorder %s22, 0
      %p89 = por %p87, %p88
      %s91 = sadd.s32 %s90, 1
      %p94 = scmp.eq.s32.totalorder %s16, 1
      %p95 = scmp.ne.s32.totalorder %s90, %s92
      %p96 = scmp.eq.s32.totalorder %s16, 0
      %p97 = por %p95, %p96
      %p98 = scmp.ne.s32.totalorder %s90, %s92
      %p99 = scmp.eq.s32.totalorder %s21, 1
      %p100 = por %p98, %p99
      %p101 = scmp.ne.s32.totalorder %s92, %s93
      %p102 = scmp.eq.s32.totalorder %s21, 0
      %p103 = por %p101, %p102
      %p104 = scmp.ne.s32.totalorder %s92, %s93
      %p105 = scmp.eq.s32.totalorder %s22, 1
      %p106 = por %p104, %p105
      %p108 = scmp.ne.s32.totalorder %s93, %s107
      %p109 = scmp.eq.s32.totalorder %s22, 0
      %p110 = por %p108, %p109
      %s111 = ssub.s32 %s23, %s35
      %p112 = scmp.eq.s32.totalorder %s111, 0
      %s114 = sadd.s32 %s113, 1
      %s115 = scalar_select %p112, %s113, %s114
      %p118 = pneg %p112
      %p119 = scmp.eq.s32.totalorder %s16, 1
      %p120 = por %p118, %p119
      %p121 = scmp.ne.s32.totalorder %s113, %s116
      %p122 = scmp.eq.s32.totalorder %s16, 0
      %p123 = por %p121, %p122
      %p124 = scmp.ne.s32.totalorder %s113, %s116
      %p125 = scmp.eq.s32.totalorder %s21, 1
      %p126 = por %p124, %p125
      %p127 = scmp.ne.s32.totalorder %s116, %s117
      %p128 = scmp.eq.s32.totalorder %s21, 0
      %p129 = por %p127, %p128
      %p130 = scmp.ne.s32.totalorder %s116, %s117
      %p131 = scmp.eq.s32.totalorder %s22, 1
      %p132 = por %p130, %p131
      %p134 = scmp.ne.s32.totalorder %s117, %s133
      %p135 = scmp.eq.s32.totalorder %s22, 0
      %p136 = por %p134, %p135
      %p137 = scmp.le.s32.totalorder 1, %s16
      %p138 = scmp.lt.s32.totalorder %s16, 3
      %p139 = pnand %p137, %p138
      %p140 = pneg %p139
      // Predicated region
      $region9: #{tpu_custom_call.1} parent=5 // pred_check
        _
      $region10: #{tpu_custom_call.1} parent=5 // pred_check_branch
        %142 = sbr.rel (%p139) target = $region12
      $region11: #{tpu_custom_call.1} parent=5 // pred_region
        %s143 = ssub.s32 %s16, 1
        // Predicated region
        $region13: #{tpu_custom_call.1} parent=11 // pred_check
          %p144 = pneg %p103
        $region14: #{tpu_custom_call.1} parent=11 // pred_check_branch
          %146 = sbr.rel (%p144) target = $region16
        $region15: #{tpu_custom_call.1} parent=11 // pred_region
          %s148 = ssub.s32 1024, 1024
          %149 = vsyncadd [#allocation7], %s148
          %s150 = sshll.u32 [#allocation8], 4
          %s151 = int_to_ptr.vmem [resolvable:$true] %s150
          %156 = dma.hbm_to_vmem [thread:$0]  %s2, 1024, %s151, [#allocation7], 64, 64, 4
        $region16: #{tpu_custom_call.1} parent=11 // pred_fallthru
          _
      $region12: #{tpu_custom_call.1} parent=5 // pred_fallthru
        _
      %p157 = scmp.lt.s32.totalorder %s16, 2
      // Predicated region
      $region17: #{tpu_custom_call.1} parent=5 // pred_check
        %p158 = pneg %p157
      $region18: #{tpu_custom_call.1} parent=5 // pred_check_branch
        %160 = sbr.rel (%p158) target = $region20
      $region19: #{tpu_custom_call.1} parent=5 // pred_region
        // Predicated region
        $region21: #{tpu_custom_call.1} parent=19 // pred_check
          %p161 = pneg %p50
        $region22: #{tpu_custom_call.1} parent=19 // pred_check_branch
          %163 = sbr.rel (%p161) target = $region24
        $region23: #{tpu_custom_call.1} parent=19 // pred_region
          %s164 = sand.u32 %s40, 1
          %s165 = scalar_lea.sflag [#allocation4], %s164
          %s166 = sand.u32 %s40, 1
          %s167 = smul.addr %s166, 32
          %s168 = scalar_lea.vmem [#allocation3], %s167
          %s169 = smul.u32 2, %s23
          %s170 = smul.u32 4, %s24
          %s172 = ssub.s32 512, 512
          %173 = vsyncadd %s165, %s172
          %s174 = smul.addr %s169, 8
          %s175 = sadd.s32 %s170, %s174
          %s176 = smul.addr %s175, 64
          %s177 = scalar_lea.hbm %s0, %s176
          %s178 = sshll.u32 %s168, 4
          %s179 = int_to_ptr.vmem [resolvable:$true] %s178
          %184 = dma.hbm_to_vmem [thread:$0]  %s177, 512, %s179, %s165, 512, 256, 16
        $region24: #{tpu_custom_call.1} parent=19 // pred_fallthru
          _
        // Predicated region
        $region25: #{tpu_custom_call.1} parent=19 // pred_check
          %p185 = pneg %p76
        $region26: #{tpu_custom_call.1} parent=19 // pred_check_branch
          %187 = sbr.rel (%p185) target = $region28
        $region27: #{tpu_custom_call.1} parent=19 // pred_region
          %s188 = sand.u32 %s16, 1
          %s189 = scalar_lea.sflag [#allocation7], %s188
          %s190 = sand.u32 %s66, 1
          %s191 = smul.addr %s190, 256
          %s192 = scalar_lea.vmem [#allocation6], %s191
          %s193 = smul.u32 4, %s24
          %s195 = ssub.s32 4096, 4096
          %196 = vsyncadd %s189, %s195
          %s197 = smul.addr %s193, 64
          %s198 = scalar_lea.hbm %s1, %s197
          %s199 = sshll.u32 %s192, 4
          %s200 = int_to_ptr.vmem [resolvable:$true] %s199
          %205 = dma.hbm_to_vmem [thread:$0]  %s198, 4096, %s200, %s189, 512, 256, 16
        $region28: #{tpu_custom_call.1} parent=19 // pred_fallthru
          _
      $region20: #{tpu_custom_call.1} parent=5 // pred_fallthru
        _
      %p206 = scmp.le.s32.totalorder 1, %s16
      %p207 = scmp.lt.s32.totalorder %s16, 3
      %p208 = pnand %p206, %p207
      %p209 = pneg %p208
      // Predicated region
      $region29: #{tpu_custom_call.1} parent=5 // pred_check
        _
      $region30: #{tpu_custom_call.1} parent=5 // pred_check_branch
        %211 = sbr.rel (%p208) target = $region32
      $region31: #{tpu_custom_call.1} parent=5 // pred_region
        %s212 = ssub.s32 %s16, 1
        %s213 = sand.u32 %s43, 1
        %s214 = scalar_lea.sflag [#allocation4], %s213
        %s215 = sand.u32 %s43, 1
        %s216 = smul.addr %s215, 32
        %s217 = scalar_lea.vmem [#allocation3], %s216
        // Predicated region
        $region33: #{tpu_custom_call.1} parent=31 // pred_check
          %p218 = pneg %p56
        $region34: #{tpu_custom_call.1} parent=31 // pred_check_branch
          %220 = sbr.rel (%p218) target = $region36
        $region35: #{tpu_custom_call.1} parent=31 // pred_region
          %221 = dma.done %s214, 512
        $region36: #{tpu_custom_call.1} parent=31 // pred_fallthru
          _
        %s222 = sand.u32 %s21, 1
        %s223 = scalar_lea.sflag [#allocation7], %s222
        %s224 = sand.u32 %s69, 1
        %s225 = smul.addr %s224, 256
        %s226 = scalar_lea.vmem [#allocation6], %s225
        // Predicated region
        $region37: #{tpu_custom_call.1} parent=31 // pred_check
          %p227 = pneg %p82
        $region38: #{tpu_custom_call.1} parent=31 // pred_check_branch
          %229 = sbr.rel (%p227) target = $region40
        $region39: #{tpu_custom_call.1} parent=31 // pred_region
          %230 = dma.done %s223, 4096
        $region40: #{tpu_custom_call.1} parent=31 // pred_fallthru
          _
        // Predicated region
        $region41: #{tpu_custom_call.1} parent=31 // pred_check
          %p231 = pneg %p103
        $region42: #{tpu_custom_call.1} parent=31 // pred_check_branch
          %233 = sbr.rel (%p231) target = $region44
        $region43: #{tpu_custom_call.1} parent=31 // pred_region
          %234 = dma.done [#allocation7], 1024
        $region44: #{tpu_custom_call.1} parent=31 // pred_fallthru
          _
        %s235 = sand.u32 %s43, 1
        %s236 = scalar_lea.sflag [#allocation4], %s235
        %s237 = sand.u32 %s43, 1
        %s238 = smul.addr %s237, 32
        %s239 = scalar_lea.vmem [#allocation3], %s238
        %p240 = pneg %p56
        %p241 = pneg %p53
        %s242 = sand.u32 %s21, 1
        %s243 = scalar_lea.sflag [#allocation7], %s242
        %s244 = sand.u32 %s69, 1
        %s245 = smul.addr %s244, 256
        %s246 = scalar_lea.vmem [#allocation6], %s245
        %p247 = pneg %p82
        %p248 = pneg %p79
        %p249 = pneg %p103
        %p250 = pneg %p100
        %p251 = pneg %p129
        %p252 = pneg %p126
        %s253 = smul.u32 2, %s25
        %s254 = smul.u32 4, %s26
        %s255 = smul.u32 4, %s26
        %s256 = smul.u32 2, %s25
        %p258 = scmp.eq.s32.totalorder %s26, 0
        // Predicated region
        $region45: #{tpu_custom_call.1} parent=31 // pred_check
          %p259 = pneg %p258
        $region46: #{tpu_custom_call.1} parent=31 // pred_check_branch
          %261 = sbr.rel (%p259) target = $region48
        $region47: #{tpu_custom_call.1} parent=31 // pred_region
          %262 = vst [vmem:[#allocation2] sm:$0xff] 0.0
          %263 = vst [vmem:[#allocation2 + $0x8] sm:$0xff] 0.0
        $region48: #{tpu_custom_call.1} parent=31 // pred_fallthru
          _
        %v264 = vld [vmem:[#allocation2] sm:$0xff]
        %v265 = vld [vmem:[#allocation2 + $0x8] sm:$0xff]
        %v266 = vld [vmem:[%s217] sm:$0xff]
        %v267 = vld [vmem:[%s217 + $0x8] sm:$0xff]
        %v268 = vld [vmem:[%s217 + $0x10] sm:$0xff]
        %v269 = vld [vmem:[%s217 + $0x18] sm:$0xff]
        %v270 = vld [vmem:[%s226] sm:$0xff]
        %v271 = vld [vmem:[%s226 + $0x8] sm:$0xff]
        %v272 = vld [vmem:[%s226 + $0x10] sm:$0xff]
        %v273 = vld [vmem:[%s226 + $0x18] sm:$0xff]
        %v274 = vld [vmem:[%s226 + $0x20] sm:$0xff]
        %v275 = vld [vmem:[%s226 + $0x28] sm:$0xff]
        %v276 = vld [vmem:[%s226 + $0x30] sm:$0xff]
        %v277 = vld [vmem:[%s226 + $0x38] sm:$0xff]
        %v278 = vld [vmem:[%s226 + $0x40] sm:$0xff]
        %v279 = vld [vmem:[%s226 + $0x48] sm:$0xff]
        %v280 = vld [vmem:[%s226 + $0x50] sm:$0xff]
        %v281 = vld [vmem:[%s226 + $0x58] sm:$0xff]
        %v282 = vld [vmem:[%s226 + $0x60] sm:$0xff]
        %v283 = vld [vmem:[%s226 + $0x68] sm:$0xff]
        %v284 = vld [vmem:[%s226 + $0x70] sm:$0xff]
        %v285 = vld [vmem:[%s226 + $0x78] sm:$0xff]
        %v286 = vld [vmem:[%s226 + $0x80] sm:$0xff]
        %v287 = vld [vmem:[%s226 + $0x88] sm:$0xff]
        %v288 = vld [vmem:[%s226 + $0x90] sm:$0xff]
        %v289 = vld [vmem:[%s226 + $0x98] sm:$0xff]
        %v290 = vld [vmem:[%s226 + $0xa0] sm:$0xff]
        %v291 = vld [vmem:[%s226 + $0xa8] sm:$0xff]
        %v292 = vld [vmem:[%s226 + $0xb0] sm:$0xff]
        %v293 = vld [vmem:[%s226 + $0xb8] sm:$0xff]
        %v294 = vld [vmem:[%s226 + $0xc0] sm:$0xff]
        %v295 = vld [vmem:[%s226 + $0xc8] sm:$0xff]
        %v296 = vld [vmem:[%s226 + $0xd0] sm:$0xff]
        %v297 = vld [vmem:[%s226 + $0xd8] sm:$0xff]
        %v298 = vld [vmem:[%s226 + $0xe0] sm:$0xff]
        %v299 = vld [vmem:[%s226 + $0xe8] sm:$0xff]
        %v300 = vld [vmem:[%s226 + $0xf0] sm:$0xff]
        %v301 = vld [vmem:[%s226 + $0xf8] sm:$0xff]
        %v306 = vunpack.c.l.b16 %v266
        %v307 = vunpack.c.h.b16 %v266
        %v308 = vunpack.c.l.b16 %v267
        %v309 = vunpack.c.h.b16 %v267
        %v310 = vunpack.c.l.b16 %v268
        %v311 = vunpack.c.h.b16 %v268
        %v312 = vunpack.c.l.b16 %v269
        %v313 = vunpack.c.h.b16 %v269
        %v314 = vpack.c.b16 %v310, %v306
        %v315 = vpack.c.b16 %v311, %v307
        %v316 = vpack.c.b16 %v312, %v308
        %v317 = vpack.c.b16 %v313, %v309
        %v354 = vunpack.c.l.b16 %v270
        %v355 = vunpack.c.h.b16 %v270
        %v356 = vunpack.c.l.b16 %v271
        %v357 = vunpack.c.h.b16 %v271
        %v358 = vunpack.c.l.b16 %v272
        %v359 = vunpack.c.h.b16 %v272
        %v360 = vunpack.c.l.b16 %v273
        %v361 = vunpack.c.h.b16 %v273
        %v362 = vunpack.c.l.b16 %v274
        %v363 = vunpack.c.h.b16 %v274
        %v364 = vunpack.c.l.b16 %v275
        %v365 = vunpack.c.h.b16 %v275
        %v366 = vunpack.c.l.b16 %v276
        %v367 = vunpack.c.h.b16 %v276
        %v368 = vunpack.c.l.b16 %v277
        %v369 = vunpack.c.h.b16 %v277
        %v370 = vunpack.c.l.b16 %v278
        %v371 = vunpack.c.h.b16 %v278
        %v372 = vunpack.c.l.b16 %v279
        %v373 = vunpack.c.h.b16 %v279
        %v374 = vunpack.c.l.b16 %v280
        %v375 = vunpack.c.h.b16 %v280
        %v376 = vunpack.c.l.b16 %v281
        %v377 = vunpack.c.h.b16 %v281
        %v378 = vunpack.c.l.b16 %v282
        %v379 = vunpack.c.h.b16 %v282
        %v380 = vunpack.c.l.b16 %v283
        %v381 = vunpack.c.h.b16 %v283
        %v382 = vunpack.c.l.b16 %v284
        %v383 = vunpack.c.h.b16 %v284
        %v384 = vunpack.c.l.b16 %v285
        %v385 = vunpack.c.h.b16 %v285
        %v386 = vunpack.c.l.b16 %v286
        %v387 = vunpack.c.h.b16 %v286
        %v388 = vunpack.c.l.b16 %v287
        %v389 = vunpack.c.h.b16 %v287
        %v390 = vunpack.c.l.b16 %v288
        %v391 = vunpack.c.h.b16 %v288
        %v392 = vunpack.c.l.b16 %v289
        %v393 = vunpack.c.h.b16 %v289
        %v394 = vunpack.c.l.b16 %v290
        %v395 = vunpack.c.h.b16 %v290
        %v396 = vunpack.c.l.b16 %v291
        %v397 = vunpack.c.h.b16 %v291
        %v398 = vunpack.c.l.b16 %v292
        %v399 = vunpack.c.h.b16 %v292
        %v400 = vunpack.c.l.b16 %v293
        %v401 = vunpack.c.h.b16 %v293
        %v402 = vunpack.c.l.b16 %v294
        %v403 = vunpack.c.h.b16 %v294
        %v404 = vunpack.c.l.b16 %v295
        %v405 = vunpack.c.h.b16 %v295
        %v406 = vunpack.c.l.b16 %v296
        %v407 = vunpack.c.h.b16 %v296
        %v408 = vunpack.c.l.b16 %v297
        %v409 = vunpack.c.h.b16 %v297
        %v410 = vunpack.c.l.b16 %v298
        %v411 = vunpack.c.h.b16 %v298
        %v412 = vunpack.c.l.b16 %v299
        %v413 = vunpack.c.h.b16 %v299
        %v414 = vunpack.c.l.b16 %v300
        %v415 = vunpack.c.h.b16 %v300
        %v416 = vunpack.c.l.b16 %v301
        %v417 = vunpack.c.h.b16 %v301
        %v418 = vpack.c.b16 %v358, %v354
        %v419 = vpack.c.b16 %v359, %v355
        %v420 = vpack.c.b16 %v360, %v356
        %v421 = vpack.c.b16 %v361, %v357
        %v422 = vpack.c.b16 %v366, %v362
        %v423 = vpack.c.b16 %v367, %v363
        %v424 = vpack.c.b16 %v368, %v364
        %v425 = vpack.c.b16 %v369, %v365
        %v426 = vpack.c.b16 %v374, %v370
        %v427 = vpack.c.b16 %v375, %v371
        %v428 = vpack.c.b16 %v376, %v372
        %v429 = vpack.c.b16 %v377, %v373
        %v430 = vpack.c.b16 %v382, %v378
        %v431 = vpack.c.b16 %v383, %v379
        %v432 = vpack.c.b16 %v384, %v380
        %v433 = vpack.c.b16 %v385, %v381
        %v434 = vpack.c.b16 %v390, %v386
        %v435 = vpack.c.b16 %v391, %v387
        %v436 = vpack.c.b16 %v392, %v388
        %v437 = vpack.c.b16 %v393, %v389
        %v438 = vpack.c.b16 %v398, %v394
        %v439 = vpack.c.b16 %v399, %v395
        %v440 = vpack.c.b16 %v400, %v396
        %v441 = vpack.c.b16 %v401, %v397
        %v442 = vpack.c.b16 %v406, %v402
        %v443 = vpack.c.b16 %v407, %v403
        %v444 = vpack.c.b16 %v408, %v404
        %v445 = vpack.c.b16 %v409, %v405
        %v446 = vpack.c.b16 %v414, %v410
        %v447 = vpack.c.b16 %v415, %v411
        %v448 = vpack.c.b16 %v416, %v412
        %v449 = vpack.c.b16 %v417, %v413
        %482 = vmatprep.subr.bf16.mxu0 %v447
        %483 = vmatpush1.bf16.xpose.msra.mxu0 %v446
        %484 = vmatprep.subr.bf16.mxu0 %v443
        %485 = vmatpush1.bf16.xpose.msra.mxu0 %v442
        %486 = vmatprep.subr.bf16.mxu0 %v439
        %487 = vmatpush1.bf16.xpose.msra.mxu0 %v438
        %488 = vmatprep.subr.bf16.mxu0 %v435
        %489 = vmatpush1.bf16.xpose.msra.mxu0 %v434
        %490 = vmatprep.subr.bf16.mxu0 %v431
        %491 = vmatpush1.bf16.xpose.msra.mxu0 %v430
        %492 = vmatprep.subr.bf16.mxu0 %v427
        %493 = vmatpush1.bf16.xpose.msra.mxu0 %v426
        %494 = vmatprep.subr.bf16.mxu0 %v423
        %495 = vmatpush1.bf16.xpose.msra.mxu0 %v422
        %496 = vmatprep.subr.bf16.mxu0 %v419
        %497 = vmatpush1.bf16.xpose.msra.mxu0 %v418
        %498 = vmatprep.subr.bf16.mxu0 0
        %499 = vmatpush2.bf16.xpose.msra.mxu0 0
        %500 = vmatprep.subr.bf16.mxu0 0
        %501 = vmatpush2.bf16.xpose.msra.mxu0 0
        %502 = vmatprep.subr.bf16.mxu0 0
        %503 = vmatpush2.bf16.xpose.msra.mxu0 0
        %504 = vmatprep.subr.bf16.mxu0 0
        %505 = vmatpush2.bf16.xpose.msra.mxu0 0
        %506 = vmatprep.subr.bf16.mxu0 0
        %507 = vmatpush2.bf16.xpose.msra.mxu0 0
        %508 = vmatprep.subr.bf16.mxu0 0
        %509 = vmatpush2.bf16.xpose.msra.mxu0 0
        %510 = vmatprep.subr.bf16.mxu0 0
        %511 = vmatpush2.bf16.xpose.msra.mxu0 0
        %512 = vmatprep.subr.bf16.mxu0 0
        %513 = vmatpush2.bf16.xpose.msra.mxu0 0
        %514 = vmatprep.mubr.bf16.mxu0 %v315
        %515 = vmatmul.mubr.bf16.gmra.mxu0 %v314
        %v516 = vpop.f32.mrf.mxu0
        %v517 = vadd.f32 0.0, %v516
        %v518 = vpop.f32.mrf.mxu0
        %v519 = vpop.f32.mrf.mxu0
        %v520 = vadd.f32 0.0, %v519
        %v521 = vpop.f32.mrf.mxu0
        %522 = vdwg.mxu0
        %523 = vmatprep.subr.bf16.mxu0 %v449
        %524 = vmatpush1.bf16.xpose.msra.mxu0 %v448
        %525 = vmatprep.subr.bf16.mxu0 %v445
        %526 = vmatpush1.bf16.xpose.msra.mxu0 %v444
        %527 = vmatprep.subr.bf16.mxu0 %v441
        %528 = vmatpush1.bf16.xpose.msra.mxu0 %v440
        %529 = vmatprep.subr.bf16.mxu0 %v437
        %530 = vmatpush1.bf16.xpose.msra.mxu0 %v436
        %531 = vmatprep.subr.bf16.mxu0 %v433
        %532 = vmatpush1.bf16.xpose.msra.mxu0 %v432
        %533 = vmatprep.subr.bf16.mxu0 %v429
        %534 = vmatpush1.bf16.xpose.msra.mxu0 %v428
        %535 = vmatprep.subr.bf16.mxu0 %v425
        %536 = vmatpush1.bf16.xpose.msra.mxu0 %v424
        %537 = vmatprep.subr.bf16.mxu0 %v421
        %538 = vmatpush1.bf16.xpose.msra.mxu0 %v420
        %539 = vmatprep.subr.bf16.mxu0 0
        %540 = vmatpush2.bf16.xpose.msra.mxu0 0
        %541 = vmatprep.subr.bf16.mxu0 0
        %542 = vmatpush2.bf16.xpose.msra.mxu0 0
        %543 = vmatprep.subr.bf16.mxu0 0
        %544 = vmatpush2.bf16.xpose.msra.mxu0 0
        %545 = vmatprep.subr.bf16.mxu0 0
        %546 = vmatpush2.bf16.xpose.msra.mxu0 0
        %547 = vmatprep.subr.bf16.mxu0 0
        %548 = vmatpush2.bf16.xpose.msra.mxu0 0
        %549 = vmatprep.subr.bf16.mxu0 0
        %550 = vmatpush2.bf16.xpose.msra.mxu0 0
        %551 = vmatprep.subr.bf16.mxu0 0
        %552 = vmatpush2.bf16.xpose.msra.mxu0 0
        %553 = vmatprep.subr.bf16.mxu0 0
        %554 = vmatpush2.bf16.xpose.msra.mxu0 0
        %555 = vmatprep.mubr.bf16.mxu0 %v317
        %556 = vmatmul.mubr.bf16.gmra.mxu0 %v316
        %v557 = vpop.f32.mrf.mxu0
        %v558 = vadd.f32 %v517, %v557
        %v559 = vpop.f32.mrf.mxu0
        %v560 = vpop.f32.mrf.mxu0
        %v561 = vadd.f32 %v520, %v560
        %v562 = vpop.f32.mrf.mxu0
        %563 = vdwg.mxu0
        %v564 = vadd.f32 %v264, %v558
        %v565 = vadd.f32 %v265, %v561
        %566 = vst [vmem:[#allocation2] sm:$0xff] %v564
        %567 = vst [vmem:[#allocation2 + $0x8] sm:$0xff] %v565
        %p568 = scmp.eq.s32.totalorder %s26, 1
        // Predicated region
        $region49: #{tpu_custom_call.1} parent=31 // pred_check
          %p569 = pneg %p568
        $region50: #{tpu_custom_call.1} parent=31 // pred_check_branch
          %571 = sbr.rel (%p569) target = $region52
        $region51: #{tpu_custom_call.1} parent=31 // pred_region
          %v572 = vld [vmem:[#allocation2] sm:$0xff]
          %v573 = vld [vmem:[#allocation2 + $0x8] sm:$0xff]
          %v574 = vmul.f32 %v572, %v572
          %v575 = vmul.f32 %v573, %v573
          %576 = vadd.xlane.f32.xlu0 %v574
          %v577 = vpop.xlane.xlu0 %576
          %578 = vadd.xlane.f32.xlu0 %v575
          %v579 = vpop.xlane.xlu0 %578
          %v580 = vmax.f32 %v577, 1e-24
          %v581 = vmax.f32 %v579, 1e-24
          %v582 = vrsqrt.pop %v580
          %v583 = vrsqrt.pop %v581
          %v584 = vpack.c.bf16 %v573, %v572
          %v585 = vld [vmem:[#allocation8] sm:$0xf]
          %v586 = vld [vmem:[#allocation8 + $0x4] sm:$0xf]
          %v587 = vld [vmem:[#allocation8 + $0x8] sm:$0xf]
          %v588 = vld [vmem:[#allocation8 + $0xc] sm:$0xf]
          %v589 = vld [vmem:[#allocation8 + $0x10] sm:$0xf]
          %v590 = vld [vmem:[#allocation8 + $0x14] sm:$0xf]
          %v591 = vld [vmem:[#allocation8 + $0x18] sm:$0xf]
          %v592 = vld [vmem:[#allocation8 + $0x1c] sm:$0xf]
          %v593 = vld [vmem:[#allocation8 + $0x20] sm:$0xf]
          %v594 = vld [vmem:[#allocation8 + $0x24] sm:$0xf]
          %v595 = vld [vmem:[#allocation8 + $0x28] sm:$0xf]
          %v596 = vld [vmem:[#allocation8 + $0x2c] sm:$0xf]
          %v597 = vld [vmem:[#allocation8 + $0x30] sm:$0xf]
          %v598 = vld [vmem:[#allocation8 + $0x34] sm:$0xf]
          %v599 = vld [vmem:[#allocation8 + $0x38] sm:$0xf]
          %v600 = vld [vmem:[#allocation8 + $0x3c] sm:$0xf]
          %v617 = vunpack.c.l.b16 %v585
          %v618 = vunpack.c.l.b16 %v586
          %v619 = vunpack.c.l.b16 %v587
          %v620 = vunpack.c.l.b16 %v588
          %v621 = vunpack.c.l.b16 %v589
          %v622 = vunpack.c.l.b16 %v590
          %v623 = vunpack.c.l.b16 %v591
          %v624 = vunpack.c.l.b16 %v592
          %v625 = vunpack.c.l.b16 %v593
          %v626 = vunpack.c.l.b16 %v594
          %v627 = vunpack.c.l.b16 %v595
          %v628 = vunpack.c.l.b16 %v596
          %v629 = vunpack.c.l.b16 %v597
          %v630 = vunpack.c.l.b16 %v598
          %v631 = vunpack.c.l.b16 %v599
          %v632 = vunpack.c.l.b16 %v600
          %v633 = vpack.c.b16 %v618, %v617
          %v634 = vpack.c.b16 %v620, %v619
          %v635 = vpack.c.b16 %v622, %v621
          %v636 = vpack.c.b16 %v624, %v623
          %v637 = vpack.c.b16 %v626, %v625
          %v638 = vpack.c.b16 %v628, %v627
          %v639 = vpack.c.b16 %v630, %v629
          %v640 = vpack.c.b16 %v632, %v631
          %649 = vmatprep.subr.bf16.mxu0 0
          %650 = vmatpush1.bf16.xpose.msra.mxu0 %v640
          %651 = vmatprep.subr.bf16.mxu0 0
          %652 = vmatpush1.bf16.xpose.msra.mxu0 %v639
          %653 = vmatprep.subr.bf16.mxu0 0
          %654 = vmatpush1.bf16.xpose.msra.mxu0 %v638
          %655 = vmatprep.subr.bf16.mxu0 0
          %656 = vmatpush1.bf16.xpose.msra.mxu0 %v637
          %657 = vmatprep.subr.bf16.mxu0 0
          %658 = vmatpush1.bf16.xpose.msra.mxu0 %v636
          %659 = vmatprep.subr.bf16.mxu0 0
          %660 = vmatpush1.bf16.xpose.msra.mxu0 %v635
          %661 = vmatprep.subr.bf16.mxu0 0
          %662 = vmatpush1.bf16.xpose.msra.mxu0 %v634
          %663 = vmatprep.subr.bf16.mxu0 0
          %664 = vmatpush1.bf16.xpose.msra.mxu0 %v633
          %665 = vmatprep.subr.bf16.mxu0 0
          %666 = vmatpush2.bf16.xpose.msra.mxu0 0
          %667 = vmatprep.subr.bf16.mxu0 0
          %668 = vmatpush2.bf16.xpose.msra.mxu0 0
          %669 = vmatprep.subr.bf16.mxu0 0
          %670 = vmatpush2.bf16.xpose.msra.mxu0 0
          %671 = vmatprep.subr.bf16.mxu0 0
          %672 = vmatpush2.bf16.xpose.msra.mxu0 0
          %673 = vmatprep.subr.bf16.mxu0 0
          %674 = vmatpush2.bf16.xpose.msra.mxu0 0
          %675 = vmatprep.subr.bf16.mxu0 0
          %676 = vmatpush2.bf16.xpose.msra.mxu0 0
          %677 = vmatprep.subr.bf16.mxu0 0
          %678 = vmatpush2.bf16.xpose.msra.mxu0 0
          %679 = vmatprep.subr.bf16.mxu0 0
          %680 = vmatpush2.bf16.xpose.msra.mxu0 0
          %681 = vmatprep.mubr.bf16.mxu0 0
          %682 = vmatmul.mubr.bf16.gmra.mxu0 %v584
          %v683 = vpop.f32.mrf.mxu0
          %v684 = vadd.f32 0.0, %v683
          %v685 = vpop.f32.mrf.mxu0
          %v686 = vpop.f32.mrf.mxu0
          %v687 = vadd.f32 0.0, %v686
          %v688 = vpop.f32.mrf.mxu0
          %689 = vdwg.mxu0
          %v690 = vmul.f32 %v684, %v582
          %v691 = vmul.f32 %v687, %v583
          %692 = vst [vmem:[#allocation9] sm:$0xff] %v690
          %693 = vst [vmem:[#allocation9 + $0x8] sm:$0xff] %v691
        $region52: #{tpu_custom_call.1} parent=31 // pred_fallthru
          _
        // Predicated region
        $region53: #{tpu_custom_call.1} parent=31 // pred_check
          %p694 = pneg %p126
        $region54: #{tpu_custom_call.1} parent=31 // pred_check_branch
          %696 = sbr.rel (%p694) target = $region56
        $region55: #{tpu_custom_call.1} parent=31 // pred_region
          %s697 = smul.u32 2, %s25
          %s699 = ssub.s32 256, 256
          %700 = vsyncadd [#allocation5], %s699
          %s701 = smul.addr %s697, 128
          %s702 = scalar_lea.hbm %s3, %s701
          %s703 = sshll.u32 [#allocation9], 4
          %s704 = int_to_ptr.vmem [resolvable:$true] %s703
          %709 = dma.vmem_to_hbm [thread:$0]  %s704, 256, %s702, [#allocation5], 128, 128, 8
        $region56: #{tpu_custom_call.1} parent=31 // pred_fallthru
          _
        // Predicated region
        $region57: #{tpu_custom_call.1} parent=31 // pred_check
          %p710 = pneg %p126
        $region58: #{tpu_custom_call.1} parent=31 // pred_check_branch
          %712 = sbr.rel (%p710) target = $region60
        $region59: #{tpu_custom_call.1} parent=31 // pred_region
          %713 = dma.done [#allocation5], 256
        $region60: #{tpu_custom_call.1} parent=31 // pred_fallthru
          _
      $region32: #{tpu_custom_call.1} parent=5 // pred_fallthru
        _
      %p714 = scmp.le.s32.totalorder 2, %s16
      // Predicated region
      $region61: #{tpu_custom_call.1} parent=5 // pred_check
        %p715 = pneg %p714
      $region62: #{tpu_custom_call.1} parent=5 // pred_check_branch
        %717 = sbr.rel (%p715) target = $region64
      $region63: #{tpu_custom_call.1} parent=5 // pred_region
        %s718 = ssub.s32 %s16, 2
      $region64: #{tpu_custom_call.1} parent=5 // pred_fallthru
        _
    $region6: #{tpu_custom_call.1} parent=1 // loop_footer
      %s20 = sadd.s32 1, %s16
    $region7: #{tpu_custom_call.1} parent=1 // loop_footer_branch
      %15 = sbr.rel target = $region3
    $region8: #{tpu_custom_call.1} parent=1 // loop_exit
      _
    %719 = vsyncpa [#allocation4], 1
    %s720 = scalar_lea.sflag [#allocation4], 1
    %721 = vsyncpa %s720, 1
    %722 = vsyncpa [#allocation7], 1
    %s723 = scalar_lea.sflag [#allocation7], 1
    %724 = vsyncpa %s723, 1
    %725 = vsyncpa [#allocation5], 1
    %s726 = scalar_lea.sflag [#allocation5], 1
    %727 = vsyncpa %s726, 1

</llo_original>
